<compile_context>
chip_gen: v7x
topology: tpu7x:2x2x1
jax: 0.10.0
libtpu: 0.0.40
codegen_flags: <defaults>
</compile_context>

<pallas_src>
import functools

import jax
import jax.numpy as jnp
from jax.experimental import pallas as pl
from jax.experimental.pallas import tpu as pltpu

LANE = 128


def _round_up(x, m):
    return ((x + m - 1) // m) * m


# ------------------------------ fused kernel ------------------------------- #

def _fused_gcn_kernel(src_ref, dst_ref,          # scalar-prefetch (SMEM) [E] int32
                      a_ref, h0_ref,             # [N,N] bf16, [N,DPAD] f32
                      *rest,
                      n_layers, residuals, hw_first, e_features, n_edges):
    # ---- unpack remaining refs -------------------------------------------- #
    layer_refs = rest[:2 * n_layers]                       # (W_l bf16, b_l f32) * L
    ef_ref, we_ref, ws_ref, bp_ref = rest[2 * n_layers: 2 * n_layers + 4]
    o_ref = rest[2 * n_layers + 4]                         # [EPAD, CPAD] f32
    h_sc, hu_sc, hv_sc = rest[2 * n_layers + 5: 2 * n_layers + 8]

    a = a_ref[...]                                         # [N, N] bf16 (loaded once)
    h = h0_ref[...]                                        # [N, DPAD] f32

    # ---- GCN layers (H stays resident, no HBM round-trips) ----------------- #
    for l in range(n_layers):
        w = layer_refs[2 * l][...]                         # [DPAD, DPAD] bf16 (BN folded)
        b = layer_refs[2 * l + 1][...]                     # [1, DPAD] f32 (BN folded)
        hb = h.astype(jnp.bfloat16)
        if hw_first[l]:                                    # dout < din: A @ (H @ W)
            hw = jnp.dot(hb, w, preferred_element_type=jnp.float32)
            z = jnp.dot(a, hw.astype(jnp.bfloat16),
                        preferred_element_type=jnp.float32)
        else:                                              # (A @ H) @ W
            ah = jnp.dot(a, hb, preferred_element_type=jnp.float32)
            z = jnp.dot(ah.astype(jnp.bfloat16), w,
                        preferred_element_type=jnp.float32)
        z = z + b                                          # bias + BN affine (folded), f32
        z = jnp.maximum(z, 0.0)                            # relu
        if residuals[l]:                                   # residual (true din == dout)
            z = z + h
        h = z                                              # dropout = identity (eval)

    # ---- park final H in VMEM scratch for dynamic per-edge gather ---------- #
    h_sc[...] = h

    for e in range(n_edges):                               # static unroll (small E)
        hu_sc[pl.ds(e, 1), :] = h_sc[pl.ds(src_ref[e], 1), :]
        hv_sc[pl.ds(e, 1), :] = h_sc[pl.ds(dst_ref[e], 1), :]

    # <h_src, h_dst>: padded lanes are exactly zero, so the 128-lane reduce is exact
    s = jnp.sum(hu_sc[...] * hv_sc[...], axis=-1, keepdims=True)   # [EPAD, 1]

    # ---- edge classifier on VPU (no MXU pass for a [E,6]x[6,C] matmul) ----- #
    ef = ef_ref[...]                                       # [EPAD, e_features]
    we = we_ref[...]                                       # [e_features, CPAD]
    acc = jnp.broadcast_to(bp_ref[...], o_ref.shape).astype(jnp.float32)
    for f in range(e_features):                            # static unroll (6)
        acc = acc + ef[:, f:f + 1] * we[f:f + 1, :]
    acc = acc + s * ws_ref[...]
    o_ref[...] = acc                                       # lane-dense unmasked store


# --------------------------------- wrapper --------------------------------- #

def gcn_net_forward(params, a_norm, h, src, dst, e_feat):
    n_layers = len(params["layers"])
    n_nodes = h.shape[0]
    n_edges, e_features = e_feat.shape
    n_classes = params["pred_w"].shape[1]

    dpad = _round_up(max([h.shape[1]] + [l["w"].shape[1] for l in params["layers"]]),
                     LANE)
    cpad = _round_up(n_classes, LANE)
    epad = _round_up(n_edges, 8)

    # fold BatchNorm (eval, fresh running stats) + bias into the weights, pad
    # to lane-dense DPAD, cast MXU operands to bf16.
    eps = 1e-5
    layer_ops = []
    residuals, hw_first = [], []
    din = h.shape[1]
    for layer in params["layers"]:
        w, b = layer["w"], layer["b"]
        gamma, beta = layer["gamma"], layer["beta"]
        dout = w.shape[1]
        scale = gamma / jnp.sqrt(1.0 + eps)           # BN eval: mean=0, var=1
        wf = w * scale[None, :]
        bf = b * scale + beta
        wp = jnp.zeros((dpad, dpad), jnp.float32).at[:w.shape[0], :dout].set(wf)
        bp = jnp.zeros((1, dpad), jnp.float32).at[0, :dout].set(bf)
        layer_ops += [wp.astype(jnp.bfloat16), bp]
        residuals.append(bool(params["residual"]) and din == dout)
        hw_first.append(dout < din)
        din = dout

    h0 = jnp.zeros((n_nodes, dpad), jnp.float32).at[:, :h.shape[1]].set(h)
    a_bf16 = a_norm.astype(jnp.bfloat16)

    pw, pb = params["pred_w"], params["pred_b"]
    we = jnp.zeros((e_features, cpad), jnp.float32).at[:, :n_classes].set(
        pw[:e_features])
    ws = jnp.zeros((1, cpad), jnp.float32).at[0, :n_classes].set(pw[e_features])
    bp_pred = jnp.zeros((1, cpad), jnp.float32).at[0, :n_classes].set(pb)
    ef_pad = jnp.zeros((epad, e_features), jnp.float32).at[:n_edges, :].set(e_feat)

    tensor_inputs = [a_bf16, h0] + layer_ops + [ef_pad, we, ws, bp_pred]

    kernel = functools.partial(
        _fused_gcn_kernel,
        n_layers=n_layers,
        residuals=tuple(residuals),
        hw_first=tuple(hw_first),
        e_features=e_features,
        n_edges=n_edges,
    )

    def _full_spec(arr):
        return pl.BlockSpec(arr.shape, lambda i, s, d: (0,) * arr.ndim)

    out = pl.pallas_call(
        kernel,
        out_shape=jax.ShapeDtypeStruct((epad, cpad), jnp.float32),
        grid_spec=pltpu.PrefetchScalarGridSpec(
            num_scalar_prefetch=2,                        # src, dst -> SMEM
            grid=(1,),
            in_specs=[_full_spec(x) for x in tensor_inputs],
            out_specs=pl.BlockSpec((epad, cpad), lambda i, s, d: (0, 0)),
            scratch_shapes=[
                pltpu.VMEM((n_nodes, dpad), jnp.float32),   # final H (gather source)
                pltpu.VMEM((epad, dpad), jnp.float32),      # h[src]
                pltpu.VMEM((epad, dpad), jnp.float32),      # h[dst]
            ],
        ),
        compiler_params=pltpu.CompilerParams(
            dimension_semantics=("arbitrary",),
        ),
    )(src.astype(jnp.int32), dst.astype(jnp.int32), *tensor_inputs)

    return out[:n_edges, :n_classes]


# ------------------------------ param setup -------------------------------- #

def init_params(key, in_dim, hidden_dim, out_dim, n_layers, e_features, n_classes,
                residual=True):
    dims = [in_dim] + [hidden_dim] * (n_layers - 1) + [out_dim]
    layers = []
    for i in range(n_layers):
        key, kw = jax.random.split(key)
        din, dout = dims[i], dims[i + 1]
        layers.append(dict(
            w=(jax.random.normal(kw, (din, dout), jnp.float32)
               * (1.0 / jnp.sqrt(din))),
            b=jnp.zeros((dout,), jnp.float32),
            gamma=jnp.ones((dout,), jnp.float32),
            beta=jnp.zeros((dout,), jnp.float32),
        ))
    key, kp = jax.random.split(key)
    pred_w = (jax.random.normal(kp, (e_features + 1, n_classes), jnp.float32)
              * (1.0 / jnp.sqrt(e_features + 1)))
    pred_b = jnp.zeros((n_classes,), jnp.float32)
    return dict(layers=layers, pred_w=pred_w, pred_b=pred_b, residual=residual)


def build_graph(key, n_nodes, n_edges):
    k1, k2 = jax.random.split(key)
    src = jax.random.randint(k1, (n_edges,), 0, n_nodes)
    dst = jax.random.randint(k2, (n_edges,), 0, n_nodes)
    # dense adjacency with self-loops, symmetric D^{-1/2} (A+I) D^{-1/2} norm
    adj = jnp.zeros((n_nodes, n_nodes), jnp.float32)
    adj = adj.at[src, dst].set(1.0)
    adj = adj.at[dst, src].set(1.0)
    adj = adj + jnp.eye(n_nodes, dtype=jnp.float32)
    deg = jnp.sum(adj, axis=1)
    d_inv_sqrt = 1.0 / jnp.sqrt(deg)
    a_norm = adj * d_inv_sqrt[:, None] * d_inv_sqrt[None, :]
    return a_norm, src, dst


# --------------------------------- main ------------------------------------ #

if __name__ == "__main__":
    # net_params (small, consistent with the module's __init__)
    in_dim, hidden_dim, out_dim = 8, 32, 32
    n_layers, e_features, n_classes = 3, 6, 4
    n_nodes, n_edges = 16, 24

    key = jax.random.PRNGKey(0)
    k_graph, k_h, k_e, k_params = jax.random.split(key, 4)

    a_norm, src, dst = build_graph(k_graph, n_nodes, n_edges)
    h = jax.random.normal(k_h, (n_nodes, in_dim), jnp.float32)
    e_feat = jax.random.normal(k_e, (n_edges, e_features), jnp.float32)

    params = init_params(k_params, in_dim, hidden_dim, out_dim,
                         n_layers, e_features, n_classes, residual=True)

    out = gcn_net_forward(params, a_norm, h, src, dst, e_feat)
    jax.block_until_ready(out)
    assert out.shape == (n_edges, n_classes)
    print("KERNEL_OK")
</pallas_src>

<mosaic_0001>
module attributes {stable_mosaic.version = 11 : i64} {
  func.func @_fused_gcn_kernel(%arg0: i32, %arg1: memref<24xi32, #tpu.memory_space<smem>>, %arg2: memref<24xi32, #tpu.memory_space<smem>>, %arg3: memref<16x16xbf16, #tpu.memory_space<vmem>>, %arg4: memref<16x128xf32, #tpu.memory_space<vmem>>, %arg5: memref<128x128xbf16, #tpu.memory_space<vmem>>, %arg6: memref<1x128xf32, #tpu.memory_space<vmem>>, %arg7: memref<128x128xbf16, #tpu.memory_space<vmem>>, %arg8: memref<1x128xf32, #tpu.memory_space<vmem>>, %arg9: memref<128x128xbf16, #tpu.memory_space<vmem>>, %arg10: memref<1x128xf32, #tpu.memory_space<vmem>>, %arg11: memref<24x6xf32, #tpu.memory_space<vmem>>, %arg12: memref<6x128xf32, #tpu.memory_space<vmem>>, %arg13: memref<1x128xf32, #tpu.memory_space<vmem>>, %arg14: memref<1x128xf32, #tpu.memory_space<vmem>>, %arg15: memref<24x128xf32, #tpu.memory_space<vmem>>, %arg16: memref<16x128xf32, #tpu.memory_space<vmem>>, %arg17: memref<24x128xf32, #tpu.memory_space<vmem>>, %arg18: memref<24x128xf32, #tpu.memory_space<vmem>>) attributes {dimension_semantics = [#tpu.dimension_semantics<arbitrary>], iteration_bounds = array<i64: 1>, scalar_prefetch = 2 : i64, scratch_operands = 3 : i64, tpu.core_type = #tpu.core_type<tc>, window_params = [{pipeline_mode = #tpu.pipeline_mode<synchronous>, transform_indices = @transform_0, window_bounds = array<i64: 16, 16>}, {pipeline_mode = #tpu.pipeline_mode<synchronous>, transform_indices = @transform_1, window_bounds = array<i64: 16, 128>}, {pipeline_mode = #tpu.pipeline_mode<synchronous>, transform_indices = @transform_2, window_bounds = array<i64: 128, 128>}, {pipeline_mode = #tpu.pipeline_mode<synchronous>, transform_indices = @transform_3, window_bounds = array<i64: 1, 128>}, {pipeline_mode = #tpu.pipeline_mode<synchronous>, transform_indices = @transform_4, window_bounds = array<i64: 128, 128>}, {pipeline_mode = #tpu.pipeline_mode<synchronous>, transform_indices = @transform_5, window_bounds = array<i64: 1, 128>}, {pipeline_mode = #tpu.pipeline_mode<synchronous>, transform_indices = @transform_6, window_bounds = array<i64: 128, 128>}, {pipeline_mode = #tpu.pipeline_mode<synchronous>, transform_indices = @transform_7, window_bounds = array<i64: 1, 128>}, {pipeline_mode = #tpu.pipeline_mode<synchronous>, transform_indices = @transform_8, window_bounds = array<i64: 24, 6>}, {pipeline_mode = #tpu.pipeline_mode<synchronous>, transform_indices = @transform_9, window_bounds = array<i64: 6, 128>}, {pipeline_mode = #tpu.pipeline_mode<synchronous>, transform_indices = @transform_10, window_bounds = array<i64: 1, 128>}, {pipeline_mode = #tpu.pipeline_mode<synchronous>, transform_indices = @transform_11, window_bounds = array<i64: 1, 128>}, {pipeline_mode = #tpu.pipeline_mode<synchronous>, transform_indices = @transform_12, window_bounds = array<i64: 24, 128>}]} {
    %c0 = arith.constant 0 : index
    %c0_0 = arith.constant 0 : index
    %0 = vector.load %arg3[%c0, %c0_0] : memref<16x16xbf16, #tpu.memory_space<vmem>>, vector<16x16xbf16>
    %c0_1 = arith.constant 0 : index
    %c0_2 = arith.constant 0 : index
    %1 = vector.load %arg4[%c0_1, %c0_2] : memref<16x128xf32, #tpu.memory_space<vmem>>, vector<16x128xf32>
    %c0_3 = arith.constant 0 : index
    %c0_4 = arith.constant 0 : index
    %2 = vector.load %arg5[%c0_3, %c0_4] : memref<128x128xbf16, #tpu.memory_space<vmem>>, vector<128x128xbf16>
    %c0_5 = arith.constant 0 : index
    %c0_6 = arith.constant 0 : index
    %3 = vector.load %arg6[%c0_5, %c0_6] : memref<1x128xf32, #tpu.memory_space<vmem>>, vector<1x128xf32>
    %4 = arith.truncf %1 : vector<16x128xf32> to vector<16x128xbf16>
    %cst = arith.constant dense<0.000000e+00> : vector<16x128xf32>
    %5 = tpu.matmul %0, %4, %cst {dimension_numbers = #tpu.dot_dimension_numbers<[1], [0], [0], [1], [0, 0, 1, 1], [], []>} : vector<16x16xbf16>, vector<16x128xbf16>, vector<16x128xf32> -> vector<16x128xf32>
    %6 = arith.truncf %5 : vector<16x128xf32> to vector<16x128xbf16>
    %cst_7 = arith.constant dense<0.000000e+00> : vector<16x128xf32>
    %7 = tpu.matmul %6, %2, %cst_7 {dimension_numbers = #tpu.dot_dimension_numbers<[1], [0], [0], [1], [0, 0, 1, 1], [], []>} : vector<16x128xbf16>, vector<128x128xbf16>, vector<16x128xf32> -> vector<16x128xf32>
    %8 = vector.broadcast %3 : vector<1x128xf32> to vector<16x128xf32>
    %9 = arith.addf %7, %8 : vector<16x128xf32>
    %cst_8 = arith.constant 0.000000e+00 : f32
    %10 = vector.broadcast %cst_8 : f32 to vector<16x128xf32>
    %11 = arith.maximumf %9, %10 : vector<16x128xf32>
    %c0_9 = arith.constant 0 : index
    %c0_10 = arith.constant 0 : index
    %12 = vector.load %arg7[%c0_9, %c0_10] : memref<128x128xbf16, #tpu.memory_space<vmem>>, vector<128x128xbf16>
    %c0_11 = arith.constant 0 : index
    %c0_12 = arith.constant 0 : index
    %13 = vector.load %arg8[%c0_11, %c0_12] : memref<1x128xf32, #tpu.memory_space<vmem>>, vector<1x128xf32>
    %14 = arith.truncf %11 : vector<16x128xf32> to vector<16x128xbf16>
    %cst_13 = arith.constant dense<0.000000e+00> : vector<16x128xf32>
    %15 = tpu.matmul %0, %14, %cst_13 {dimension_numbers = #tpu.dot_dimension_numbers<[1], [0], [0], [1], [0, 0, 1, 1], [], []>} : vector<16x16xbf16>, vector<16x128xbf16>, vector<16x128xf32> -> vector<16x128xf32>
    %16 = arith.truncf %15 : vector<16x128xf32> to vector<16x128xbf16>
    %cst_14 = arith.constant dense<0.000000e+00> : vector<16x128xf32>
    %17 = tpu.matmul %16, %12, %cst_14 {dimension_numbers = #tpu.dot_dimension_numbers<[1], [0], [0], [1], [0, 0, 1, 1], [], []>} : vector<16x128xbf16>, vector<128x128xbf16>, vector<16x128xf32> -> vector<16x128xf32>
    %18 = vector.broadcast %13 : vector<1x128xf32> to vector<16x128xf32>
    %19 = arith.addf %17, %18 : vector<16x128xf32>
    %cst_15 = arith.constant 0.000000e+00 : f32
    %20 = vector.broadcast %cst_15 : f32 to vector<16x128xf32>
    %21 = arith.maximumf %19, %20 : vector<16x128xf32>
    %22 = arith.addf %21, %11 : vector<16x128xf32>
    %c0_16 = arith.constant 0 : index
    %c0_17 = arith.constant 0 : index
    %23 = vector.load %arg9[%c0_16, %c0_17] : memref<128x128xbf16, #tpu.memory_space<vmem>>, vector<128x128xbf16>
    %c0_18 = arith.constant 0 : index
    %c0_19 = arith.constant 0 : index
    %24 = vector.load %arg10[%c0_18, %c0_19] : memref<1x128xf32, #tpu.memory_space<vmem>>, vector<1x128xf32>
    %25 = arith.truncf %22 : vector<16x128xf32> to vector<16x128xbf16>
    %cst_20 = arith.constant dense<0.000000e+00> : vector<16x128xf32>
    %26 = tpu.matmul %0, %25, %cst_20 {dimension_numbers = #tpu.dot_dimension_numbers<[1], [0], [0], [1], [0, 0, 1, 1], [], []>} : vector<16x16xbf16>, vector<16x128xbf16>, vector<16x128xf32> -> vector<16x128xf32>
    %27 = arith.truncf %26 : vector<16x128xf32> to vector<16x128xbf16>
    %cst_21 = arith.constant dense<0.000000e+00> : vector<16x128xf32>
    %28 = tpu.matmul %27, %23, %cst_21 {dimension_numbers = #tpu.dot_dimension_numbers<[1], [0], [0], [1], [0, 0, 1, 1], [], []>} : vector<16x128xbf16>, vector<128x128xbf16>, vector<16x128xf32> -> vector<16x128xf32>
    %29 = vector.broadcast %24 : vector<1x128xf32> to vector<16x128xf32>
    %30 = arith.addf %28, %29 : vector<16x128xf32>
    %cst_22 = arith.constant 0.000000e+00 : f32
    %31 = vector.broadcast %cst_22 : f32 to vector<16x128xf32>
    %32 = arith.maximumf %30, %31 : vector<16x128xf32>
    %33 = arith.addf %32, %22 : vector<16x128xf32>
    %c0_23 = arith.constant 0 : index
    %c0_24 = arith.constant 0 : index
    %34 = vector.load %arg16[%c0_23, %c0_24] : memref<16x128xf32, #tpu.memory_space<vmem>>, vector<16x128xf32>
    tpu.vector_store %arg16[%c0_23, %c0_24], %33 {strides = array<i32>} : memref<16x128xf32, #tpu.memory_space<vmem>>, vector<16x128xf32>,
    %c0_25 = arith.constant 0 : index
    %35 = memref.load %arg1[%c0_25] : memref<24xi32, #tpu.memory_space<smem>>
    %36 = arith.index_cast %35 : i32 to index
    %c0_26 = arith.constant 0 : index
    %37 = vector.load %arg16[%36, %c0_26] : memref<16x128xf32, #tpu.memory_space<vmem>>, vector<1x128xf32>
    %c0_27 = arith.constant 0 : index
    %c0_28 = arith.constant 0 : index
    %38 = vector.load %arg17[%c0_27, %c0_28] : memref<24x128xf32, #tpu.memory_space<vmem>>, vector<1x128xf32>
    tpu.vector_store %arg17[%c0_27, %c0_28], %37 {strides = array<i32>} : memref<24x128xf32, #tpu.memory_space<vmem>>, vector<1x128xf32>,
    %c0_29 = arith.constant 0 : index
    %39 = memref.load %arg2[%c0_29] : memref<24xi32, #tpu.memory_space<smem>>
    %40 = arith.index_cast %39 : i32 to index
    %c0_30 = arith.constant 0 : index
    %41 = vector.load %arg16[%40, %c0_30] : memref<16x128xf32, #tpu.memory_space<vmem>>, vector<1x128xf32>
    %c0_31 = arith.constant 0 : index
    %c0_32 = arith.constant 0 : index
    %42 = vector.load %arg18[%c0_31, %c0_32] : memref<24x128xf32, #tpu.memory_space<vmem>>, vector<1x128xf32>
    tpu.vector_store %arg18[%c0_31, %c0_32], %41 {strides = array<i32>} : memref<24x128xf32, #tpu.memory_space<vmem>>, vector<1x128xf32>,
    %c1 = arith.constant 1 : index
    %43 = memref.load %arg1[%c1] : memref<24xi32, #tpu.memory_space<smem>>
    %44 = arith.index_cast %43 : i32 to index
    %c0_33 = arith.constant 0 : index
    %45 = vector.load %arg16[%44, %c0_33] : memref<16x128xf32, #tpu.memory_space<vmem>>, vector<1x128xf32>
    %c1_34 = arith.constant 1 : index
    %c0_35 = arith.constant 0 : index
    %46 = vector.load %arg17[%c1_34, %c0_35] : memref<24x128xf32, #tpu.memory_space<vmem>>, vector<1x128xf32>
    tpu.vector_store %arg17[%c1_34, %c0_35], %45 {strides = array<i32>} : memref<24x128xf32, #tpu.memory_space<vmem>>, vector<1x128xf32>,
    %c1_36 = arith.constant 1 : index
    %47 = memref.load %arg2[%c1_36] : memref<24xi32, #tpu.memory_space<smem>>
    %48 = arith.index_cast %47 : i32 to index
    %c0_37 = arith.constant 0 : index
    %49 = vector.load %arg16[%48, %c0_37] : memref<16x128xf32, #tpu.memory_space<vmem>>, vector<1x128xf32>
    %c1_38 = arith.constant 1 : index
    %c0_39 = arith.constant 0 : index
    %50 = vector.load %arg18[%c1_38, %c0_39] : memref<24x128xf32, #tpu.memory_space<vmem>>, vector<1x128xf32>
    tpu.vector_store %arg18[%c1_38, %c0_39], %49 {strides = array<i32>} : memref<24x128xf32, #tpu.memory_space<vmem>>, vector<1x128xf32>,
    %c2 = arith.constant 2 : index
    %51 = memref.load %arg1[%c2] : memref<24xi32, #tpu.memory_space<smem>>
    %52 = arith.index_cast %51 : i32 to index
    %c0_40 = arith.constant 0 : index
    %53 = vector.load %arg16[%52, %c0_40] : memref<16x128xf32, #tpu.memory_space<vmem>>, vector<1x128xf32>
    %c2_41 = arith.constant 2 : index
    %c0_42 = arith.constant 0 : index
    %54 = vector.load %arg17[%c2_41, %c0_42] : memref<24x128xf32, #tpu.memory_space<vmem>>, vector<1x128xf32>
    tpu.vector_store %arg17[%c2_41, %c0_42], %53 {strides = array<i32>} : memref<24x128xf32, #tpu.memory_space<vmem>>, vector<1x128xf32>,
    %c2_43 = arith.constant 2 : index
    %55 = memref.load %arg2[%c2_43] : memref<24xi32, #tpu.memory_space<smem>>
    %56 = arith.index_cast %55 : i32 to index
    %c0_44 = arith.constant 0 : index
    %57 = vector.load %arg16[%56, %c0_44] : memref<16x128xf32, #tpu.memory_space<vmem>>, vector<1x128xf32>
    %c2_45 = arith.constant 2 : index
    %c0_46 = arith.constant 0 : index
    %58 = vector.load %arg18[%c2_45, %c0_46] : memref<24x128xf32, #tpu.memory_space<vmem>>, vector<1x128xf32>
    tpu.vector_store %arg18[%c2_45, %c0_46], %57 {strides = array<i32>} : memref<24x128xf32, #tpu.memory_space<vmem>>, vector<1x128xf32>,
    %c3 = arith.constant 3 : index
    %59 = memref.load %arg1[%c3] : memref<24xi32, #tpu.memory_space<smem>>
    %60 = arith.index_cast %59 : i32 to index
    %c0_47 = arith.constant 0 : index
    %61 = vector.load %arg16[%60, %c0_47] : memref<16x128xf32, #tpu.memory_space<vmem>>, vector<1x128xf32>
    %c3_48 = arith.constant 3 : index
    %c0_49 = arith.constant 0 : index
    %62 = vector.load %arg17[%c3_48, %c0_49] : memref<24x128xf32, #tpu.memory_space<vmem>>, vector<1x128xf32>
    tpu.vector_store %arg17[%c3_48, %c0_49], %61 {strides = array<i32>} : memref<24x128xf32, #tpu.memory_space<vmem>>, vector<1x128xf32>,
    %c3_50 = arith.constant 3 : index
    %63 = memref.load %arg2[%c3_50] : memref<24xi32, #tpu.memory_space<smem>>
    %64 = arith.index_cast %63 : i32 to index
    %c0_51 = arith.constant 0 : index
    %65 = vector.load %arg16[%64, %c0_51] : memref<16x128xf32, #tpu.memory_space<vmem>>, vector<1x128xf32>
    %c3_52 = arith.constant 3 : index
    %c0_53 = arith.constant 0 : index
    %66 = vector.load %arg18[%c3_52, %c0_53] : memref<24x128xf32, #tpu.memory_space<vmem>>, vector<1x128xf32>
    tpu.vector_store %arg18[%c3_52, %c0_53], %65 {strides = array<i32>} : memref<24x128xf32, #tpu.memory_space<vmem>>, vector<1x128xf32>,
    %c4 = arith.constant 4 : index
    %67 = memref.load %arg1[%c4] : memref<24xi32, #tpu.memory_space<smem>>
    %68 = arith.index_cast %67 : i32 to index
    %c0_54 = arith.constant 0 : index
    %69 = vector.load %arg16[%68, %c0_54] : memref<16x128xf32, #tpu.memory_space<vmem>>, vector<1x128xf32>
    %c4_55 = arith.constant 4 : index
    %c0_56 = arith.constant 0 : index
    %70 = vector.load %arg17[%c4_55, %c0_56] : memref<24x128xf32, #tpu.memory_space<vmem>>, vector<1x128xf32>
    tpu.vector_store %arg17[%c4_55, %c0_56], %69 {strides = array<i32>} : memref<24x128xf32, #tpu.memory_space<vmem>>, vector<1x128xf32>,
    %c4_57 = arith.constant 4 : index
    %71 = memref.load %arg2[%c4_57] : memref<24xi32, #tpu.memory_space<smem>>
    %72 = arith.index_cast %71 : i32 to index
    %c0_58 = arith.constant 0 : index
    %73 = vector.load %arg16[%72, %c0_58] : memref<16x128xf32, #tpu.memory_space<vmem>>, vector<1x128xf32>
    %c4_59 = arith.constant 4 : index
    %c0_60 = arith.constant 0 : index
    %74 = vector.load %arg18[%c4_59, %c0_60] : memref<24x128xf32, #tpu.memory_space<vmem>>, vector<1x128xf32>
    tpu.vector_store %arg18[%c4_59, %c0_60], %73 {strides = array<i32>} : memref<24x128xf32, #tpu.memory_space<vmem>>, vector<1x128xf32>,
    %c5 = arith.constant 5 : index
    %75 = memref.load %arg1[%c5] : memref<24xi32, #tpu.memory_space<smem>>
    %76 = arith.index_cast %75 : i32 to index
    %c0_61 = arith.constant 0 : index
    %77 = vector.load %arg16[%76, %c0_61] : memref<16x128xf32, #tpu.memory_space<vmem>>, vector<1x128xf32>
    %c5_62 = arith.constant 5 : index
    %c0_63 = arith.constant 0 : index
    %78 = vector.load %arg17[%c5_62, %c0_63] : memref<24x128xf32, #tpu.memory_space<vmem>>, vector<1x128xf32>
    tpu.vector_store %arg17[%c5_62, %c0_63], %77 {strides = array<i32>} : memref<24x128xf32, #tpu.memory_space<vmem>>, vector<1x128xf32>,
    %c5_64 = arith.constant 5 : index
    %79 = memref.load %arg2[%c5_64] : memref<24xi32, #tpu.memory_space<smem>>
    %80 = arith.index_cast %79 : i32 to index
    %c0_65 = arith.constant 0 : index
    %81 = vector.load %arg16[%80, %c0_65] : memref<16x128xf32, #tpu.memory_space<vmem>>, vector<1x128xf32>
    %c5_66 = arith.constant 5 : index
    %c0_67 = arith.constant 0 : index
    %82 = vector.load %arg18[%c5_66, %c0_67] : memref<24x128xf32, #tpu.memory_space<vmem>>, vector<1x128xf32>
    tpu.vector_store %arg18[%c5_66, %c0_67], %81 {strides = array<i32>} : memref<24x128xf32, #tpu.memory_space<vmem>>, vector<1x128xf32>,
    %c6 = arith.constant 6 : index
    %83 = memref.load %arg1[%c6] : memref<24xi32, #tpu.memory_space<smem>>
    %84 = arith.index_cast %83 : i32 to index
    %c0_68 = arith.constant 0 : index
    %85 = vector.load %arg16[%84, %c0_68] : memref<16x128xf32, #tpu.memory_space<vmem>>, vector<1x128xf32>
    %c6_69 = arith.constant 6 : index
    %c0_70 = arith.constant 0 : index
    %86 = vector.load %arg17[%c6_69, %c0_70] : memref<24x128xf32, #tpu.memory_space<vmem>>, vector<1x128xf32>
    tpu.vector_store %arg17[%c6_69, %c0_70], %85 {strides = array<i32>} : memref<24x128xf32, #tpu.memory_space<vmem>>, vector<1x128xf32>,
    %c6_71 = arith.constant 6 : index
    %87 = memref.load %arg2[%c6_71] : memref<24xi32, #tpu.memory_space<smem>>
    %88 = arith.index_cast %87 : i32 to index
    %c0_72 = arith.constant 0 : index
    %89 = vector.load %arg16[%88, %c0_72] : memref<16x128xf32, #tpu.memory_space<vmem>>, vector<1x128xf32>
    %c6_73 = arith.constant 6 : index
    %c0_74 = arith.constant 0 : index
    %90 = vector.load %arg18[%c6_73, %c0_74] : memref<24x128xf32, #tpu.memory_space<vmem>>, vector<1x128xf32>
    tpu.vector_store %arg18[%c6_73, %c0_74], %89 {strides = array<i32>} : memref<24x128xf32, #tpu.memory_space<vmem>>, vector<1x128xf32>,
    %c7 = arith.constant 7 : index
    %91 = memref.load %arg1[%c7] : memref<24xi32, #tpu.memory_space<smem>>
    %92 = arith.index_cast %91 : i32 to index
    %c0_75 = arith.constant 0 : index
    %93 = vector.load %arg16[%92, %c0_75] : memref<16x128xf32, #tpu.memory_space<vmem>>, vector<1x128xf32>
    %c7_76 = arith.constant 7 : index
    %c0_77 = arith.constant 0 : index
    %94 = vector.load %arg17[%c7_76, %c0_77] : memref<24x128xf32, #tpu.memory_space<vmem>>, vector<1x128xf32>
    tpu.vector_store %arg17[%c7_76, %c0_77], %93 {strides = array<i32>} : memref<24x128xf32, #tpu.memory_space<vmem>>, vector<1x128xf32>,
    %c7_78 = arith.constant 7 : index
    %95 = memref.load %arg2[%c7_78] : memref<24xi32, #tpu.memory_space<smem>>
    %96 = arith.index_cast %95 : i32 to index
    %c0_79 = arith.constant 0 : index
    %97 = vector.load %arg16[%96, %c0_79] : memref<16x128xf32, #tpu.memory_space<vmem>>, vector<1x128xf32>
    %c7_80 = arith.constant 7 : index
    %c0_81 = arith.constant 0 : index
    %98 = vector.load %arg18[%c7_80, %c0_81] : memref<24x128xf32, #tpu.memory_space<vmem>>, vector<1x128xf32>
    tpu.vector_store %arg18[%c7_80, %c0_81], %97 {strides = array<i32>} : memref<24x128xf32, #tpu.memory_space<vmem>>, vector<1x128xf32>,
    %c8 = arith.constant 8 : index
    %99 = memref.load %arg1[%c8] : memref<24xi32, #tpu.memory_space<smem>>
    %100 = arith.index_cast %99 : i32 to index
    %c0_82 = arith.constant 0 : index
    %101 = vector.load %arg16[%100, %c0_82] : memref<16x128xf32, #tpu.memory_space<vmem>>, vector<1x128xf32>
    %c8_83 = arith.constant 8 : index
    %c0_84 = arith.constant 0 : index
    %102 = vector.load %arg17[%c8_83, %c0_84] : memref<24x128xf32, #tpu.memory_space<vmem>>, vector<1x128xf32>
    tpu.vector_store %arg17[%c8_83, %c0_84], %101 {strides = array<i32>} : memref<24x128xf32, #tpu.memory_space<vmem>>, vector<1x128xf32>,
    %c8_85 = arith.constant 8 : index
    %103 = memref.load %arg2[%c8_85] : memref<24xi32, #tpu.memory_space<smem>>
    %104 = arith.index_cast %103 : i32 to index
    %c0_86 = arith.constant 0 : index
    %105 = vector.load %arg16[%104, %c0_86] : memref<16x128xf32, #tpu.memory_space<vmem>>, vector<1x128xf32>
    %c8_87 = arith.constant 8 : index
    %c0_88 = arith.constant 0 : index
    %106 = vector.load %arg18[%c8_87, %c0_88] : memref<24x128xf32, #tpu.memory_space<vmem>>, vector<1x128xf32>
    tpu.vector_store %arg18[%c8_87, %c0_88], %105 {strides = array<i32>} : memref<24x128xf32, #tpu.memory_space<vmem>>, vector<1x128xf32>,
    %c9 = arith.constant 9 : index
    %107 = memref.load %arg1[%c9] : memref<24xi32, #tpu.memory_space<smem>>
    %108 = arith.index_cast %107 : i32 to index
    %c0_89 = arith.constant 0 : index
    %109 = vector.load %arg16[%108, %c0_89] : memref<16x128xf32, #tpu.memory_space<vmem>>, vector<1x128xf32>
    %c9_90 = arith.constant 9 : index
    %c0_91 = arith.constant 0 : index
    %110 = vector.load %arg17[%c9_90, %c0_91] : memref<24x128xf32, #tpu.memory_space<vmem>>, vector<1x128xf32>
    tpu.vector_store %arg17[%c9_90, %c0_91], %109 {strides = array<i32>} : memref<24x128xf32, #tpu.memory_space<vmem>>, vector<1x128xf32>,
    %c9_92 = arith.constant 9 : index
    %111 = memref.load %arg2[%c9_92] : memref<24xi32, #tpu.memory_space<smem>>
    %112 = arith.index_cast %111 : i32 to index
    %c0_93 = arith.constant 0 : index
    %113 = vector.load %arg16[%112, %c0_93] : memref<16x128xf32, #tpu.memory_space<vmem>>, vector<1x128xf32>
    %c9_94 = arith.constant 9 : index
    %c0_95 = arith.constant 0 : index
    %114 = vector.load %arg18[%c9_94, %c0_95] : memref<24x128xf32, #tpu.memory_space<vmem>>, vector<1x128xf32>
    tpu.vector_store %arg18[%c9_94, %c0_95], %113 {strides = array<i32>} : memref<24x128xf32, #tpu.memory_space<vmem>>, vector<1x128xf32>,
    %c10 = arith.constant 10 : index
    %115 = memref.load %arg1[%c10] : memref<24xi32, #tpu.memory_space<smem>>
    %116 = arith.index_cast %115 : i32 to index
    %c0_96 = arith.constant 0 : index
    %117 = vector.load %arg16[%116, %c0_96] : memref<16x128xf32, #tpu.memory_space<vmem>>, vector<1x128xf32>
    %c10_97 = arith.constant 10 : index
    %c0_98 = arith.constant 0 : index
    %118 = vector.load %arg17[%c10_97, %c0_98] : memref<24x128xf32, #tpu.memory_space<vmem>>, vector<1x128xf32>
    tpu.vector_store %arg17[%c10_97, %c0_98], %117 {strides = array<i32>} : memref<24x128xf32, #tpu.memory_space<vmem>>, vector<1x128xf32>,
    %c10_99 = arith.constant 10 : index
    %119 = memref.load %arg2[%c10_99] : memref<24xi32, #tpu.memory_space<smem>>
    %120 = arith.index_cast %119 : i32 to index
    %c0_100 = arith.constant 0 : index
    %121 = vector.load %arg16[%120, %c0_100] : memref<16x128xf32, #tpu.memory_space<vmem>>, vector<1x128xf32>
    %c10_101 = arith.constant 10 : index
    %c0_102 = arith.constant 0 : index
    %122 = vector.load %arg18[%c10_101, %c0_102] : memref<24x128xf32, #tpu.memory_space<vmem>>, vector<1x128xf32>
    tpu.vector_store %arg18[%c10_101, %c0_102], %121 {strides = array<i32>} : memref<24x128xf32, #tpu.memory_space<vmem>>, vector<1x128xf32>,
    %c11 = arith.constant 11 : index
    %123 = memref.load %arg1[%c11] : memref<24xi32, #tpu.memory_space<smem>>
    %124 = arith.index_cast %123 : i32 to index
    %c0_103 = arith.constant 0 : index
    %125 = vector.load %arg16[%124, %c0_103] : memref<16x128xf32, #tpu.memory_space<vmem>>, vector<1x128xf32>
    %c11_104 = arith.constant 11 : index
    %c0_105 = arith.constant 0 : index
    %126 = vector.load %arg17[%c11_104, %c0_105] : memref<24x128xf32, #tpu.memory_space<vmem>>, vector<1x128xf32>
    tpu.vector_store %arg17[%c11_104, %c0_105], %125 {strides = array<i32>} : memref<24x128xf32, #tpu.memory_space<vmem>>, vector<1x128xf32>,
    %c11_106 = arith.constant 11 : index
    %127 = memref.load %arg2[%c11_106] : memref<24xi32, #tpu.memory_space<smem>>
    %128 = arith.index_cast %127 : i32 to index
    %c0_107 = arith.constant 0 : index
    %129 = vector.load %arg16[%128, %c0_107] : memref<16x128xf32, #tpu.memory_space<vmem>>, vector<1x128xf32>
    %c11_108 = arith.constant 11 : index
    %c0_109 = arith.constant 0 : index
    %130 = vector.load %arg18[%c11_108, %c0_109] : memref<24x128xf32, #tpu.memory_space<vmem>>, vector<1x128xf32>
    tpu.vector_store %arg18[%c11_108, %c0_109], %129 {strides = array<i32>} : memref<24x128xf32, #tpu.memory_space<vmem>>, vector<1x128xf32>,
    %c12 = arith.constant 12 : index
    %131 = memref.load %arg1[%c12] : memref<24xi32, #tpu.memory_space<smem>>
    %132 = arith.index_cast %131 : i32 to index
    %c0_110 = arith.constant 0 : index
    %133 = vector.load %arg16[%132, %c0_110] : memref<16x128xf32, #tpu.memory_space<vmem>>, vector<1x128xf32>
    %c12_111 = arith.constant 12 : index
    %c0_112 = arith.constant 0 : index
    %134 = vector.load %arg17[%c12_111, %c0_112] : memref<24x128xf32, #tpu.memory_space<vmem>>, vector<1x128xf32>
    tpu.vector_store %arg17[%c12_111, %c0_112], %133 {strides = array<i32>} : memref<24x128xf32, #tpu.memory_space<vmem>>, vector<1x128xf32>,
    %c12_113 = arith.constant 12 : index
    %135 = memref.load %arg2[%c12_113] : memref<24xi32, #tpu.memory_space<smem>>
    %136 = arith.index_cast %135 : i32 to index
    %c0_114 = arith.constant 0 : index
    %137 = vector.load %arg16[%136, %c0_114] : memref<16x128xf32, #tpu.memory_space<vmem>>, vector<1x128xf32>
    %c12_115 = arith.constant 12 : index
    %c0_116 = arith.constant 0 : index
    %138 = vector.load %arg18[%c12_115, %c0_116] : memref<24x128xf32, #tpu.memory_space<vmem>>, vector<1x128xf32>
    tpu.vector_store %arg18[%c12_115, %c0_116], %137 {strides = array<i32>} : memref<24x128xf32, #tpu.memory_space<vmem>>, vector<1x128xf32>,
    %c13 = arith.constant 13 : index
    %139 = memref.load %arg1[%c13] : memref<24xi32, #tpu.memory_space<smem>>
    %140 = arith.index_cast %139 : i32 to index
    %c0_117 = arith.constant 0 : index
    %141 = vector.load %arg16[%140, %c0_117] : memref<16x128xf32, #tpu.memory_space<vmem>>, vector<1x128xf32>
    %c13_118 = arith.constant 13 : index
    %c0_119 = arith.constant 0 : index
    %142 = vector.load %arg17[%c13_118, %c0_119] : memref<24x128xf32, #tpu.memory_space<vmem>>, vector<1x128xf32>
    tpu.vector_store %arg17[%c13_118, %c0_119], %141 {strides = array<i32>} : memref<24x128xf32, #tpu.memory_space<vmem>>, vector<1x128xf32>,
    %c13_120 = arith.constant 13 : index
    %143 = memref.load %arg2[%c13_120] : memref<24xi32, #tpu.memory_space<smem>>
    %144 = arith.index_cast %143 : i32 to index
    %c0_121 = arith.constant 0 : index
    %145 = vector.load %arg16[%144, %c0_121] : memref<16x128xf32, #tpu.memory_space<vmem>>, vector<1x128xf32>
    %c13_122 = arith.constant 13 : index
    %c0_123 = arith.constant 0 : index
    %146 = vector.load %arg18[%c13_122, %c0_123] : memref<24x128xf32, #tpu.memory_space<vmem>>, vector<1x128xf32>
    tpu.vector_store %arg18[%c13_122, %c0_123], %145 {strides = array<i32>} : memref<24x128xf32, #tpu.memory_space<vmem>>, vector<1x128xf32>,
    %c14 = arith.constant 14 : index
    %147 = memref.load %arg1[%c14] : memref<24xi32, #tpu.memory_space<smem>>
    %148 = arith.index_cast %147 : i32 to index
    %c0_124 = arith.constant 0 : index
    %149 = vector.load %arg16[%148, %c0_124] : memref<16x128xf32, #tpu.memory_space<vmem>>, vector<1x128xf32>
    %c14_125 = arith.constant 14 : index
    %c0_126 = arith.constant 0 : index
    %150 = vector.load %arg17[%c14_125, %c0_126] : memref<24x128xf32, #tpu.memory_space<vmem>>, vector<1x128xf32>
    tpu.vector_store %arg17[%c14_125, %c0_126], %149 {strides = array<i32>} : memref<24x128xf32, #tpu.memory_space<vmem>>, vector<1x128xf32>,
    %c14_127 = arith.constant 14 : index
    %151 = memref.load %arg2[%c14_127] : memref<24xi32, #tpu.memory_space<smem>>
    %152 = arith.index_cast %151 : i32 to index
    %c0_128 = arith.constant 0 : index
    %153 = vector.load %arg16[%152, %c0_128] : memref<16x128xf32, #tpu.memory_space<vmem>>, vector<1x128xf32>
    %c14_129 = arith.constant 14 : index
    %c0_130 = arith.constant 0 : index
    %154 = vector.load %arg18[%c14_129, %c0_130] : memref<24x128xf32, #tpu.memory_space<vmem>>, vector<1x128xf32>
    tpu.vector_store %arg18[%c14_129, %c0_130], %153 {strides = array<i32>} : memref<24x128xf32, #tpu.memory_space<vmem>>, vector<1x128xf32>,
    %c15 = arith.constant 15 : index
    %155 = memref.load %arg1[%c15] : memref<24xi32, #tpu.memory_space<smem>>
    %156 = arith.index_cast %155 : i32 to index
    %c0_131 = arith.constant 0 : index
    %157 = vector.load %arg16[%156, %c0_131] : memref<16x128xf32, #tpu.memory_space<vmem>>, vector<1x128xf32>
    %c15_132 = arith.constant 15 : index
    %c0_133 = arith.constant 0 : index
    %158 = vector.load %arg17[%c15_132, %c0_133] : memref<24x128xf32, #tpu.memory_space<vmem>>, vector<1x128xf32>
    tpu.vector_store %arg17[%c15_132, %c0_133], %157 {strides = array<i32>} : memref<24x128xf32, #tpu.memory_space<vmem>>, vector<1x128xf32>,
    %c15_134 = arith.constant 15 : index
    %159 = memref.load %arg2[%c15_134] : memref<24xi32, #tpu.memory_space<smem>>
    %160 = arith.index_cast %159 : i32 to index
    %c0_135 = arith.constant 0 : index
    %161 = vector.load %arg16[%160, %c0_135] : memref<16x128xf32, #tpu.memory_space<vmem>>, vector<1x128xf32>
    %c15_136 = arith.constant 15 : index
    %c0_137 = arith.constant 0 : index
    %162 = vector.load %arg18[%c15_136, %c0_137] : memref<24x128xf32, #tpu.memory_space<vmem>>, vector<1x128xf32>
    tpu.vector_store %arg18[%c15_136, %c0_137], %161 {strides = array<i32>} : memref<24x128xf32, #tpu.memory_space<vmem>>, vector<1x128xf32>,
    %c16 = arith.constant 16 : index
    %163 = memref.load %arg1[%c16] : memref<24xi32, #tpu.memory_space<smem>>
    %164 = arith.index_cast %163 : i32 to index
    %c0_138 = arith.constant 0 : index
    %165 = vector.load %arg16[%164, %c0_138] : memref<16x128xf32, #tpu.memory_space<vmem>>, vector<1x128xf32>
    %c16_139 = arith.constant 16 : index
    %c0_140 = arith.constant 0 : index
    %166 = vector.load %arg17[%c16_139, %c0_140] : memref<24x128xf32, #tpu.memory_space<vmem>>, vector<1x128xf32>
    tpu.vector_store %arg17[%c16_139, %c0_140], %165 {strides = array<i32>} : memref<24x128xf32, #tpu.memory_space<vmem>>, vector<1x128xf32>,
    %c16_141 = arith.constant 16 : index
    %167 = memref.load %arg2[%c16_141] : memref<24xi32, #tpu.memory_space<smem>>
    %168 = arith.index_cast %167 : i32 to index
    %c0_142 = arith.constant 0 : index
    %169 = vector.load %arg16[%168, %c0_142] : memref<16x128xf32, #tpu.memory_space<vmem>>, vector<1x128xf32>
    %c16_143 = arith.constant 16 : index
    %c0_144 = arith.constant 0 : index
    %170 = vector.load %arg18[%c16_143, %c0_144] : memref<24x128xf32, #tpu.memory_space<vmem>>, vector<1x128xf32>
    tpu.vector_store %arg18[%c16_143, %c0_144], %169 {strides = array<i32>} : memref<24x128xf32, #tpu.memory_space<vmem>>, vector<1x128xf32>,
    %c17 = arith.constant 17 : index
    %171 = memref.load %arg1[%c17] : memref<24xi32, #tpu.memory_space<smem>>
    %172 = arith.index_cast %171 : i32 to index
    %c0_145 = arith.constant 0 : index
    %173 = vector.load %arg16[%172, %c0_145] : memref<16x128xf32, #tpu.memory_space<vmem>>, vector<1x128xf32>
    %c17_146 = arith.constant 17 : index
    %c0_147 = arith.constant 0 : index
    %174 = vector.load %arg17[%c17_146, %c0_147] : memref<24x128xf32, #tpu.memory_space<vmem>>, vector<1x128xf32>
    tpu.vector_store %arg17[%c17_146, %c0_147], %173 {strides = array<i32>} : memref<24x128xf32, #tpu.memory_space<vmem>>, vector<1x128xf32>,
    %c17_148 = arith.constant 17 : index
    %175 = memref.load %arg2[%c17_148] : memref<24xi32, #tpu.memory_space<smem>>
    %176 = arith.index_cast %175 : i32 to index
    %c0_149 = arith.constant 0 : index
    %177 = vector.load %arg16[%176, %c0_149] : memref<16x128xf32, #tpu.memory_space<vmem>>, vector<1x128xf32>
    %c17_150 = arith.constant 17 : index
    %c0_151 = arith.constant 0 : index
    %178 = vector.load %arg18[%c17_150, %c0_151] : memref<24x128xf32, #tpu.memory_space<vmem>>, vector<1x128xf32>
    tpu.vector_store %arg18[%c17_150, %c0_151], %177 {strides = array<i32>} : memref<24x128xf32, #tpu.memory_space<vmem>>, vector<1x128xf32>,
    %c18 = arith.constant 18 : index
    %179 = memref.load %arg1[%c18] : memref<24xi32, #tpu.memory_space<smem>>
    %180 = arith.index_cast %179 : i32 to index
    %c0_152 = arith.constant 0 : index
    %181 = vector.load %arg16[%180, %c0_152] : memref<16x128xf32, #tpu.memory_space<vmem>>, vector<1x128xf32>
    %c18_153 = arith.constant 18 : index
    %c0_154 = arith.constant 0 : index
    %182 = vector.load %arg17[%c18_153, %c0_154] : memref<24x128xf32, #tpu.memory_space<vmem>>, vector<1x128xf32>
    tpu.vector_store %arg17[%c18_153, %c0_154], %181 {strides = array<i32>} : memref<24x128xf32, #tpu.memory_space<vmem>>, vector<1x128xf32>,
    %c18_155 = arith.constant 18 : index
    %183 = memref.load %arg2[%c18_155] : memref<24xi32, #tpu.memory_space<smem>>
    %184 = arith.index_cast %183 : i32 to index
    %c0_156 = arith.constant 0 : index
    %185 = vector.load %arg16[%184, %c0_156] : memref<16x128xf32, #tpu.memory_space<vmem>>, vector<1x128xf32>
    %c18_157 = arith.constant 18 : index
    %c0_158 = arith.constant 0 : index
    %186 = vector.load %arg18[%c18_157, %c0_158] : memref<24x128xf32, #tpu.memory_space<vmem>>, vector<1x128xf32>
    tpu.vector_store %arg18[%c18_157, %c0_158], %185 {strides = array<i32>} : memref<24x128xf32, #tpu.memory_space<vmem>>, vector<1x128xf32>,
    %c19 = arith.constant 19 : index
    %187 = memref.load %arg1[%c19] : memref<24xi32, #tpu.memory_space<smem>>
    %188 = arith.index_cast %187 : i32 to index
    %c0_159 = arith.constant 0 : index
    %189 = vector.load %arg16[%188, %c0_159] : memref<16x128xf32, #tpu.memory_space<vmem>>, vector<1x128xf32>
    %c19_160 = arith.constant 19 : index
    %c0_161 = arith.constant 0 : index
    %190 = vector.load %arg17[%c19_160, %c0_161] : memref<24x128xf32, #tpu.memory_space<vmem>>, vector<1x128xf32>
    tpu.vector_store %arg17[%c19_160, %c0_161], %189 {strides = array<i32>} : memref<24x128xf32, #tpu.memory_space<vmem>>, vector<1x128xf32>,
    %c19_162 = arith.constant 19 : index
    %191 = memref.load %arg2[%c19_162] : memref<24xi32, #tpu.memory_space<smem>>
    %192 = arith.index_cast %191 : i32 to index
    %c0_163 = arith.constant 0 : index
    %193 = vector.load %arg16[%192, %c0_163] : memref<16x128xf32, #tpu.memory_space<vmem>>, vector<1x128xf32>
    %c19_164 = arith.constant 19 : index
    %c0_165 = arith.constant 0 : index
    %194 = vector.load %arg18[%c19_164, %c0_165] : memref<24x128xf32, #tpu.memory_space<vmem>>, vector<1x128xf32>
    tpu.vector_store %arg18[%c19_164, %c0_165], %193 {strides = array<i32>} : memref<24x128xf32, #tpu.memory_space<vmem>>, vector<1x128xf32>,
    %c20 = arith.constant 20 : index
    %195 = memref.load %arg1[%c20] : memref<24xi32, #tpu.memory_space<smem>>
    %196 = arith.index_cast %195 : i32 to index
    %c0_166 = arith.constant 0 : index
    %197 = vector.load %arg16[%196, %c0_166] : memref<16x128xf32, #tpu.memory_space<vmem>>, vector<1x128xf32>
    %c20_167 = arith.constant 20 : index
    %c0_168 = arith.constant 0 : index
    %198 = vector.load %arg17[%c20_167, %c0_168] : memref<24x128xf32, #tpu.memory_space<vmem>>, vector<1x128xf32>
    tpu.vector_store %arg17[%c20_167, %c0_168], %197 {strides = array<i32>} : memref<24x128xf32, #tpu.memory_space<vmem>>, vector<1x128xf32>,
    %c20_169 = arith.constant 20 : index
    %199 = memref.load %arg2[%c20_169] : memref<24xi32, #tpu.memory_space<smem>>
    %200 = arith.index_cast %199 : i32 to index
    %c0_170 = arith.constant 0 : index
    %201 = vector.load %arg16[%200, %c0_170] : memref<16x128xf32, #tpu.memory_space<vmem>>, vector<1x128xf32>
    %c20_171 = arith.constant 20 : index
    %c0_172 = arith.constant 0 : index
    %202 = vector.load %arg18[%c20_171, %c0_172] : memref<24x128xf32, #tpu.memory_space<vmem>>, vector<1x128xf32>
    tpu.vector_store %arg18[%c20_171, %c0_172], %201 {strides = array<i32>} : memref<24x128xf32, #tpu.memory_space<vmem>>, vector<1x128xf32>,
    %c21 = arith.constant 21 : index
    %203 = memref.load %arg1[%c21] : memref<24xi32, #tpu.memory_space<smem>>
    %204 = arith.index_cast %203 : i32 to index
    %c0_173 = arith.constant 0 : index
    %205 = vector.load %arg16[%204, %c0_173] : memref<16x128xf32, #tpu.memory_space<vmem>>, vector<1x128xf32>
    %c21_174 = arith.constant 21 : index
    %c0_175 = arith.constant 0 : index
    %206 = vector.load %arg17[%c21_174, %c0_175] : memref<24x128xf32, #tpu.memory_space<vmem>>, vector<1x128xf32>
    tpu.vector_store %arg17[%c21_174, %c0_175], %205 {strides = array<i32>} : memref<24x128xf32, #tpu.memory_space<vmem>>, vector<1x128xf32>,
    %c21_176 = arith.constant 21 : index
    %207 = memref.load %arg2[%c21_176] : memref<24xi32, #tpu.memory_space<smem>>
    %208 = arith.index_cast %207 : i32 to index
    %c0_177 = arith.constant 0 : index
    %209 = vector.load %arg16[%208, %c0_177] : memref<16x128xf32, #tpu.memory_space<vmem>>, vector<1x128xf32>
    %c21_178 = arith.constant 21 : index
    %c0_179 = arith.constant 0 : index
    %210 = vector.load %arg18[%c21_178, %c0_179] : memref<24x128xf32, #tpu.memory_space<vmem>>, vector<1x128xf32>
    tpu.vector_store %arg18[%c21_178, %c0_179], %209 {strides = array<i32>} : memref<24x128xf32, #tpu.memory_space<vmem>>, vector<1x128xf32>,
    %c22 = arith.constant 22 : index
    %211 = memref.load %arg1[%c22] : memref<24xi32, #tpu.memory_space<smem>>
    %212 = arith.index_cast %211 : i32 to index
    %c0_180 = arith.constant 0 : index
    %213 = vector.load %arg16[%212, %c0_180] : memref<16x128xf32, #tpu.memory_space<vmem>>, vector<1x128xf32>
    %c22_181 = arith.constant 22 : index
    %c0_182 = arith.constant 0 : index
    %214 = vector.load %arg17[%c22_181, %c0_182] : memref<24x128xf32, #tpu.memory_space<vmem>>, vector<1x128xf32>
    tpu.vector_store %arg17[%c22_181, %c0_182], %213 {strides = array<i32>} : memref<24x128xf32, #tpu.memory_space<vmem>>, vector<1x128xf32>,
    %c22_183 = arith.constant 22 : index
    %215 = memref.load %arg2[%c22_183] : memref<24xi32, #tpu.memory_space<smem>>
    %216 = arith.index_cast %215 : i32 to index
    %c0_184 = arith.constant 0 : index
    %217 = vector.load %arg16[%216, %c0_184] : memref<16x128xf32, #tpu.memory_space<vmem>>, vector<1x128xf32>
    %c22_185 = arith.constant 22 : index
    %c0_186 = arith.constant 0 : index
    %218 = vector.load %arg18[%c22_185, %c0_186] : memref<24x128xf32, #tpu.memory_space<vmem>>, vector<1x128xf32>
    tpu.vector_store %arg18[%c22_185, %c0_186], %217 {strides = array<i32>} : memref<24x128xf32, #tpu.memory_space<vmem>>, vector<1x128xf32>,
    %c23 = arith.constant 23 : index
    %219 = memref.load %arg1[%c23] : memref<24xi32, #tpu.memory_space<smem>>
    %220 = arith.index_cast %219 : i32 to index
    %c0_187 = arith.constant 0 : index
    %221 = vector.load %arg16[%220, %c0_187] : memref<16x128xf32, #tpu.memory_space<vmem>>, vector<1x128xf32>
    %c23_188 = arith.constant 23 : index
    %c0_189 = arith.constant 0 : index
    %222 = vector.load %arg17[%c23_188, %c0_189] : memref<24x128xf32, #tpu.memory_space<vmem>>, vector<1x128xf32>
    tpu.vector_store %arg17[%c23_188, %c0_189], %221 {strides = array<i32>} : memref<24x128xf32, #tpu.memory_space<vmem>>, vector<1x128xf32>,
    %c23_190 = arith.constant 23 : index
    %223 = memref.load %arg2[%c23_190] : memref<24xi32, #tpu.memory_space<smem>>
    %224 = arith.index_cast %223 : i32 to index
    %c0_191 = arith.constant 0 : index
    %225 = vector.load %arg16[%224, %c0_191] : memref<16x128xf32, #tpu.memory_space<vmem>>, vector<1x128xf32>
    %c23_192 = arith.constant 23 : index
    %c0_193 = arith.constant 0 : index
    %226 = vector.load %arg18[%c23_192, %c0_193] : memref<24x128xf32, #tpu.memory_space<vmem>>, vector<1x128xf32>
    tpu.vector_store %arg18[%c23_192, %c0_193], %225 {strides = array<i32>} : memref<24x128xf32, #tpu.memory_space<vmem>>, vector<1x128xf32>,
    %c0_194 = arith.constant 0 : index
    %c0_195 = arith.constant 0 : index
    %227 = vector.load %arg17[%c0_194, %c0_195] : memref<24x128xf32, #tpu.memory_space<vmem>>, vector<24x128xf32>
    %c0_196 = arith.constant 0 : index
    %c0_197 = arith.constant 0 : index
    %228 = vector.load %arg18[%c0_196, %c0_197] : memref<24x128xf32, #tpu.memory_space<vmem>>, vector<24x128xf32>
    %229 = arith.mulf %227, %228 : vector<24x128xf32>
    %cst_198 = arith.constant dense<0.000000e+00> : vector<24xf32>
    %230 = vector.multi_reduction <add>, %229, %cst_198 [1] : vector<24x128xf32> to vector<24xf32>
    %231 = vector.shape_cast %230 : vector<24xf32> to vector<24x1xf32>
    %c0_199 = arith.constant 0 : index
    %c0_200 = arith.constant 0 : index
    %232 = vector.load %arg11[%c0_199, %c0_200] : memref<24x6xf32, #tpu.memory_space<vmem>>, vector<24x6xf32>
    %c0_201 = arith.constant 0 : index
    %c0_202 = arith.constant 0 : index
    %233 = vector.load %arg12[%c0_201, %c0_202] : memref<6x128xf32, #tpu.memory_space<vmem>>, vector<6x128xf32>
    %c0_203 = arith.constant 0 : index
    %c0_204 = arith.constant 0 : index
    %234 = vector.load %arg14[%c0_203, %c0_204] : memref<1x128xf32, #tpu.memory_space<vmem>>, vector<1x128xf32>
    %235 = vector.shape_cast %234 : vector<1x128xf32> to vector<1x128xf32>
    %236 = vector.broadcast %235 : vector<1x128xf32> to vector<24x128xf32>
    %237 = vector.extract_strided_slice %232 {offsets = [0, 0], sizes = [24, 1], strides = [1, 1]} : vector<24x6xf32> to vector<24x1xf32>
    %238 = vector.extract_strided_slice %233 {offsets = [0, 0], sizes = [1, 128], strides = [1, 1]} : vector<6x128xf32> to vector<1x128xf32>
    %239 = vector.broadcast %237 : vector<24x1xf32> to vector<24x128xf32>
    %240 = vector.broadcast %238 : vector<1x128xf32> to vector<24x128xf32>
    %241 = arith.mulf %239, %240 : vector<24x128xf32>
    %242 = arith.addf %236, %241 : vector<24x128xf32>
    %243 = vector.extract_strided_slice %232 {offsets = [0, 1], sizes = [24, 1], strides = [1, 1]} : vector<24x6xf32> to vector<24x1xf32>
    %244 = vector.extract_strided_slice %233 {offsets = [1, 0], sizes = [1, 128], strides = [1, 1]} : vector<6x128xf32> to vector<1x128xf32>
    %245 = vector.broadcast %243 : vector<24x1xf32> to vector<24x128xf32>
    %246 = vector.broadcast %244 : vector<1x128xf32> to vector<24x128xf32>
    %247 = arith.mulf %245, %246 : vector<24x128xf32>
    %248 = arith.addf %242, %247 : vector<24x128xf32>
    %249 = vector.extract_strided_slice %232 {offsets = [0, 2], sizes = [24, 1], strides = [1, 1]} : vector<24x6xf32> to vector<24x1xf32>
    %250 = vector.extract_strided_slice %233 {offsets = [2, 0], sizes = [1, 128], strides = [1, 1]} : vector<6x128xf32> to vector<1x128xf32>
    %251 = vector.broadcast %249 : vector<24x1xf32> to vector<24x128xf32>
    %252 = vector.broadcast %250 : vector<1x128xf32> to vector<24x128xf32>
    %253 = arith.mulf %251, %252 : vector<24x128xf32>
    %254 = arith.addf %248, %253 : vector<24x128xf32>
    %255 = vector.extract_strided_slice %232 {offsets = [0, 3], sizes = [24, 1], strides = [1, 1]} : vector<24x6xf32> to vector<24x1xf32>
    %256 = vector.extract_strided_slice %233 {offsets = [3, 0], sizes = [1, 128], strides = [1, 1]} : vector<6x128xf32> to vector<1x128xf32>
    %257 = vector.broadcast %255 : vector<24x1xf32> to vector<24x128xf32>
    %258 = vector.broadcast %256 : vector<1x128xf32> to vector<24x128xf32>
    %259 = arith.mulf %257, %258 : vector<24x128xf32>
    %260 = arith.addf %254, %259 : vector<24x128xf32>
    %261 = vector.extract_strided_slice %232 {offsets = [0, 4], sizes = [24, 1], strides = [1, 1]} : vector<24x6xf32> to vector<24x1xf32>
    %262 = vector.extract_strided_slice %233 {offsets = [4, 0], sizes = [1, 128], strides = [1, 1]} : vector<6x128xf32> to vector<1x128xf32>
    %263 = vector.broadcast %261 : vector<24x1xf32> to vector<24x128xf32>
    %264 = vector.broadcast %262 : vector<1x128xf32> to vector<24x128xf32>
    %265 = arith.mulf %263, %264 : vector<24x128xf32>
    %266 = arith.addf %260, %265 : vector<24x128xf32>
    %267 = vector.extract_strided_slice %232 {offsets = [0, 5], sizes = [24, 1], strides = [1, 1]} : vector<24x6xf32> to vector<24x1xf32>
    %268 = vector.extract_strided_slice %233 {offsets = [5, 0], sizes = [1, 128], strides = [1, 1]} : vector<6x128xf32> to vector<1x128xf32>
    %269 = vector.broadcast %267 : vector<24x1xf32> to vector<24x128xf32>
    %270 = vector.broadcast %268 : vector<1x128xf32> to vector<24x128xf32>
    %271 = arith.mulf %269, %270 : vector<24x128xf32>
    %272 = arith.addf %266, %271 : vector<24x128xf32>
    %c0_205 = arith.constant 0 : index
    %c0_206 = arith.constant 0 : index
    %273 = vector.load %arg13[%c0_205, %c0_206] : memref<1x128xf32, #tpu.memory_space<vmem>>, vector<1x128xf32>
    %274 = vector.broadcast %231 : vector<24x1xf32> to vector<24x128xf32>
    %275 = vector.broadcast %273 : vector<1x128xf32> to vector<24x128xf32>
    %276 = arith.mulf %274, %275 : vector<24x128xf32>
    %277 = arith.addf %272, %276 : vector<24x128xf32>
    %c0_207 = arith.constant 0 : index
    %c0_208 = arith.constant 0 : index
    %278 = vector.load %arg15[%c0_207, %c0_208] : memref<24x128xf32, #tpu.memory_space<vmem>>, vector<24x128xf32>
    tpu.vector_store %arg15[%c0_207, %c0_208], %277 {strides = array<i32>} : memref<24x128xf32, #tpu.memory_space<vmem>>, vector<24x128xf32>,
    return
  }
  func.func @transform_0(%arg0: i32, %arg1: memref<24xi32, #tpu.memory_space<smem>>, %arg2: memref<24xi32, #tpu.memory_space<smem>>) -> (i32, i32) {
    %c0_i32 = arith.constant 0 : i32
    %c0_i32_0 = arith.constant 0 : i32
    %c0_i32_1 = arith.constant 0 : i32
    return %c0_i32, %c0_i32_0 : i32, i32
  }
  func.func @transform_1(%arg0: i32, %arg1: memref<24xi32, #tpu.memory_space<smem>>, %arg2: memref<24xi32, #tpu.memory_space<smem>>) -> (i32, i32) {
    %c0_i32 = arith.constant 0 : i32
    %c0_i32_0 = arith.constant 0 : i32
    %c0_i32_1 = arith.constant 0 : i32
    return %c0_i32, %c0_i32_0 : i32, i32
  }
  func.func @transform_2(%arg0: i32, %arg1: memref<24xi32, #tpu.memory_space<smem>>, %arg2: memref<24xi32, #tpu.memory_space<smem>>) -> (i32, i32) {
    %c0_i32 = arith.constant 0 : i32
    %c0_i32_0 = arith.constant 0 : i32
    %c0_i32_1 = arith.constant 0 : i32
    return %c0_i32, %c0_i32_0 : i32, i32
  }
  func.func @transform_3(%arg0: i32, %arg1: memref<24xi32, #tpu.memory_space<smem>>, %arg2: memref<24xi32, #tpu.memory_space<smem>>) -> (i32, i32) {
    %c0_i32 = arith.constant 0 : i32
    %c0_i32_0 = arith.constant 0 : i32
    %c0_i32_1 = arith.constant 0 : i32
    return %c0_i32, %c0_i32_0 : i32, i32
  }
  func.func @transform_4(%arg0: i32, %arg1: memref<24xi32, #tpu.memory_space<smem>>, %arg2: memref<24xi32, #tpu.memory_space<smem>>) -> (i32, i32) {
    %c0_i32 = arith.constant 0 : i32
    %c0_i32_0 = arith.constant 0 : i32
    %c0_i32_1 = arith.constant 0 : i32
    return %c0_i32, %c0_i32_0 : i32, i32
  }
  func.func @transform_5(%arg0: i32, %arg1: memref<24xi32, #tpu.memory_space<smem>>, %arg2: memref<24xi32, #tpu.memory_space<smem>>) -> (i32, i32) {
    %c0_i32 = arith.constant 0 : i32
    %c0_i32_0 = arith.constant 0 : i32
    %c0_i32_1 = arith.constant 0 : i32
    return %c0_i32, %c0_i32_0 : i32, i32
  }
  func.func @transform_6(%arg0: i32, %arg1: memref<24xi32, #tpu.memory_space<smem>>, %arg2: memref<24xi32, #tpu.memory_space<smem>>) -> (i32, i32) {
    %c0_i32 = arith.constant 0 : i32
    %c0_i32_0 = arith.constant 0 : i32
    %c0_i32_1 = arith.constant 0 : i32
    return %c0_i32, %c0_i32_0 : i32, i32
  }
  func.func @transform_7(%arg0: i32, %arg1: memref<24xi32, #tpu.memory_space<smem>>, %arg2: memref<24xi32, #tpu.memory_space<smem>>) -> (i32, i32) {
    %c0_i32 = arith.constant 0 : i32
    %c0_i32_0 = arith.constant 0 : i32
    %c0_i32_1 = arith.constant 0 : i32
    return %c0_i32, %c0_i32_0 : i32, i32
  }
  func.func @transform_8(%arg0: i32, %arg1: memref<24xi32, #tpu.memory_space<smem>>, %arg2: memref<24xi32, #tpu.memory_space<smem>>) -> (i32, i32) {
    %c0_i32 = arith.constant 0 : i32
    %c0_i32_0 = arith.constant 0 : i32
    %c0_i32_1 = arith.constant 0 : i32
    return %c0_i32, %c0_i32_0 : i32, i32
  }
  func.func @transform_9(%arg0: i32, %arg1: memref<24xi32, #tpu.memory_space<smem>>, %arg2: memref<24xi32, #tpu.memory_space<smem>>) -> (i32, i32) {
    %c0_i32 = arith.constant 0 : i32
    %c0_i32_0 = arith.constant 0 : i32
    %c0_i32_1 = arith.constant 0 : i32
    return %c0_i32, %c0_i32_0 : i32, i32
  }
  func.func @transform_10(%arg0: i32, %arg1: memref<24xi32, #tpu.memory_space<smem>>, %arg2: memref<24xi32, #tpu.memory_space<smem>>) -> (i32, i32) {
    %c0_i32 = arith.constant 0 : i32
    %c0_i32_0 = arith.constant 0 : i32
    %c0_i32_1 = arith.constant 0 : i32
    return %c0_i32, %c0_i32_0 : i32, i32
  }
  func.func @transform_11(%arg0: i32, %arg1: memref<24xi32, #tpu.memory_space<smem>>, %arg2: memref<24xi32, #tpu.memory_space<smem>>) -> (i32, i32) {
    %c0_i32 = arith.constant 0 : i32
    %c0_i32_0 = arith.constant 0 : i32
    %c0_i32_1 = arith.constant 0 : i32
    return %c0_i32, %c0_i32_0 : i32, i32
  }
  func.func @transform_12(%arg0: i32, %arg1: memref<24xi32, #tpu.memory_space<smem>>, %arg2: memref<24xi32, #tpu.memory_space<smem>>) -> (i32, i32) {
    %c0_i32 = arith.constant 0 : i32
    %c0_i32_0 = arith.constant 0 : i32
    %c0_i32_1 = arith.constant 0 : i32
    return %c0_i32, %c0_i32_0 : i32, i32
  }
}

</mosaic_0001>

<llo_original>
// kernel: tpu_custom_call.1
$region0: #{tpu_custom_call.1}
  #allocation0 [shape = 'u32[]', space=smem, size = 0x4, offset = 0x4, fixed_abs, tag = 'smem constant byte address 0x4 - core index']
  #allocation1 [shape = 'u32[144,128]{1,0:T(1,128)}', space=vmem, size = 0x12000, scoped, tag = 'internal scratch']
  #allocation2 [shape = 'f32[16,128]{1,0:T(8,128)}', space=vmem, size = 0x2000, scoped, tag = 'scratch operand']
  #allocation3 [shape = 'f32[24,128]{1,0:T(8,128)}', space=vmem, size = 0x3000, scoped, tag = 'scratch operand']
  #allocation4 [shape = 'f32[24,128]{1,0:T(8,128)}', space=vmem, size = 0x3000, scoped, tag = 'scratch operand']
  #allocation5 [shape = 's32[1]{0}', space=sflag, size = 0x4, scoped, tag = 'scoped memory for tpu_custom_call.1']
  #allocation6 [shape = 'u8[512]{0}', space=smem, size = 0x200, scoped, tag = 'prefetched SMEM operand 0']
  #allocation7 [shape = 'u8[512]{0}', space=smem, size = 0x200, scoped, tag = 'prefetched SMEM operand 1']
  %s0 = inlined_call_operand.hbm [shape: s32[24], index: 0, kind: input, shape index: {}]
  %s1 = inlined_call_operand.vmem [shape: s32[24], index: 1, kind: input, shape index: {}]
  %s2 = inlined_call_operand.vmem [shape: bf16[16,16], index: 2, kind: input, shape index: {}]
  %s3 = inlined_call_operand.vmem [shape: f32[16,128], index: 3, kind: input, shape index: {}]
  %s4 = inlined_call_operand.hbm [shape: bf16[128,128], index: 4, kind: input, shape index: {}]
  %s5 = inlined_call_operand.vmem [shape: f32[1,128], index: 5, kind: input, shape index: {}]
  %s6 = inlined_call_operand.hbm [shape: bf16[128,128], index: 6, kind: input, shape index: {}]
  %s7 = inlined_call_operand.vmem [shape: f32[1,128], index: 7, kind: input, shape index: {}]
  %s8 = inlined_call_operand.hbm [shape: bf16[128,128], index: 8, kind: input, shape index: {}]
  %s9 = inlined_call_operand.vmem [shape: f32[1,128], index: 9, kind: input, shape index: {}]
  %s10 = inlined_call_operand.vmem [shape: f32[24,6], index: 10, kind: input, shape index: {}]
  %s11 = inlined_call_operand.vmem [shape: f32[6,128], index: 11, kind: input, shape index: {}]
  %s12 = inlined_call_operand.vmem [shape: f32[1,128], index: 12, kind: input, shape index: {}]
  %s13 = inlined_call_operand.vmem [shape: f32[1,128], index: 13, kind: input, shape index: {}]
  %s14 = inlined_call_operand.hbm [shape: f32[24,128], index: 14, kind: output, shape index: {}]
  %s15 = sld [smem:[#allocation0]]
  $region70: #{tpu_custom_call.1} parent=0
    _
  %s17 = ssub.s32 1, %s15
  %s18 = scalar_select 0, %s17, %s15
  %20 = dma.hbm_to_smem %s0, 16, [#allocation6], [#allocation5]
  %s21 = sshll.u32 %s1, 4
  %s22 = int_to_ptr.vmem [resolvable:$true] %s21
  %24 = dma.vmem_to_smem %s22, 16, [#allocation7], [#allocation5]
  %25 = dma.done [#allocation5], 32
  %26 = sfence
  $region1: #{tpu_custom_call.1} parent=0
    #allocation8 [shape = 'u8[32768]{0}', space=vmem, size = 0x8000, scoped, tag = 'input window, operand 4, single buffered']
    #allocation9 [shape = 's32[1]{0}', space=sflag, size = 0x4, scoped, tag = 'scoped memory for tpu_custom_call.1']
    #allocation10 [shape = 's32[1]{0}', space=sflag, size = 0x4, scoped, tag = 'scoped memory for tpu_custom_call.1']
    #allocation11 [shape = 'u8[32768]{0}', space=vmem, size = 0x8000, scoped, tag = 'input window, operand 6, single buffered']
    #allocation12 [shape = 's32[1]{0}', space=sflag, size = 0x4, scoped, tag = 'scoped memory for tpu_custom_call.1']
    #allocation13 [shape = 'u8[32768]{0}', space=vmem, size = 0x8000, scoped, tag = 'input window, operand 8, single buffered']
    #allocation14 [shape = 'u8[12288]{0}', space=vmem, size = 0x3000, scoped, tag = 'output window, operand 0, single buffered']
    %27 = vsyncpa [#allocation9], 0
    %28 = vsyncpa [#allocation12], 0
    %29 = vsyncpa [#allocation10], 0
    // Predicated region
    $region2: #{tpu_custom_call.1} parent=1 // pred_check
      _
    $region3: #{tpu_custom_call.1} parent=1 // pred_check_branch
      %31 = sbr.rel (0) target = $region5
    $region4: #{tpu_custom_call.1} parent=1 // pred_region
      _
    $region5: #{tpu_custom_call.1} parent=1 // pred_fallthru
      _
    // Predicated region
    $region6: #{tpu_custom_call.1} parent=1 // pred_check
      _
    $region7: #{tpu_custom_call.1} parent=1 // pred_check_branch
      %33 = sbr.rel (0) target = $region9
    $region8: #{tpu_custom_call.1} parent=1 // pred_region
      _
    $region9: #{tpu_custom_call.1} parent=1 // pred_fallthru
      _
    // Predicated region
    $region10: #{tpu_custom_call.1} parent=1 // pred_check
      _
    $region11: #{tpu_custom_call.1} parent=1 // pred_check_branch
      %35 = sbr.rel (0) target = $region13
    $region12: #{tpu_custom_call.1} parent=1 // pred_region
      %s37 = ssub.s32 1024, 1024
      %38 = vsyncadd [#allocation9], %s37
      %s39 = sshll.u32 [#allocation8], 4
      %s40 = int_to_ptr.vmem [resolvable:$true] %s39
      %45 = dma.hbm_to_vmem [thread:$0]  %s4, 1024, %s40, [#allocation9], 64, 64, 4
    $region13: #{tpu_custom_call.1} parent=1 // pred_fallthru
      _
    // Predicated region
    $region14: #{tpu_custom_call.1} parent=1 // pred_check
      _
    $region15: #{tpu_custom_call.1} parent=1 // pred_check_branch
      %47 = sbr.rel (0) target = $region17
    $region16: #{tpu_custom_call.1} parent=1 // pred_region
      _
    $region17: #{tpu_custom_call.1} parent=1 // pred_fallthru
      _
    // Predicated region
    $region18: #{tpu_custom_call.1} parent=1 // pred_check
      _
    $region19: #{tpu_custom_call.1} parent=1 // pred_check_branch
      %49 = sbr.rel (0) target = $region21
    $region20: #{tpu_custom_call.1} parent=1 // pred_region
      %s51 = ssub.s32 1024, 1024
      %52 = vsyncadd [#allocation12], %s51
      %s53 = sshll.u32 [#allocation11], 4
      %s54 = int_to_ptr.vmem [resolvable:$true] %s53
      %59 = dma.hbm_to_vmem [thread:$0]  %s6, 1024, %s54, [#allocation12], 64, 64, 4
    $region21: #{tpu_custom_call.1} parent=1 // pred_fallthru
      _
    // Predicated region
    $region22: #{tpu_custom_call.1} parent=1 // pred_check
      _
    $region23: #{tpu_custom_call.1} parent=1 // pred_check_branch
      %61 = sbr.rel (0) target = $region25
    $region24: #{tpu_custom_call.1} parent=1 // pred_region
      _
    $region25: #{tpu_custom_call.1} parent=1 // pred_fallthru
      _
    // Predicated region
    $region26: #{tpu_custom_call.1} parent=1 // pred_check
      _
    $region27: #{tpu_custom_call.1} parent=1 // pred_check_branch
      %63 = sbr.rel (0) target = $region29
    $region28: #{tpu_custom_call.1} parent=1 // pred_region
      %s65 = ssub.s32 1024, 1024
      %66 = vsyncadd [#allocation12], %s65
      %s67 = sshll.u32 [#allocation13], 4
      %s68 = int_to_ptr.vmem [resolvable:$true] %s67
      %73 = dma.hbm_to_vmem [thread:$0]  %s8, 1024, %s68, [#allocation12], 64, 64, 4
    $region29: #{tpu_custom_call.1} parent=1 // pred_fallthru
      _
    // Predicated region
    $region30: #{tpu_custom_call.1} parent=1 // pred_check
      _
    $region31: #{tpu_custom_call.1} parent=1 // pred_check_branch
      %75 = sbr.rel (0) target = $region33
    $region32: #{tpu_custom_call.1} parent=1 // pred_region
      _
    $region33: #{tpu_custom_call.1} parent=1 // pred_fallthru
      _
    // Predicated region
    $region34: #{tpu_custom_call.1} parent=1 // pred_check
      _
    $region35: #{tpu_custom_call.1} parent=1 // pred_check_branch
      %77 = sbr.rel (0) target = $region37
    $region36: #{tpu_custom_call.1} parent=1 // pred_region
      _
    $region37: #{tpu_custom_call.1} parent=1 // pred_fallthru
      _
    // Predicated region
    $region38: #{tpu_custom_call.1} parent=1 // pred_check
      _
    $region39: #{tpu_custom_call.1} parent=1 // pred_check_branch
      %79 = sbr.rel (0) target = $region41
    $region40: #{tpu_custom_call.1} parent=1 // pred_region
      _
    $region41: #{tpu_custom_call.1} parent=1 // pred_fallthru
      _
    // Predicated region
    $region42: #{tpu_custom_call.1} parent=1 // pred_check
      _
    $region43: #{tpu_custom_call.1} parent=1 // pred_check_branch
      %81 = sbr.rel (0) target = $region45
    $region44: #{tpu_custom_call.1} parent=1 // pred_region
      _
    $region45: #{tpu_custom_call.1} parent=1 // pred_fallthru
      _
    // Predicated region
    $region46: #{tpu_custom_call.1} parent=1 // pred_check
      _
    $region47: #{tpu_custom_call.1} parent=1 // pred_check_branch
      %83 = sbr.rel (0) target = $region49
    $region48: #{tpu_custom_call.1} parent=1 // pred_region
      _
    $region49: #{tpu_custom_call.1} parent=1 // pred_fallthru
      _
    // Predicated region
    $region50: #{tpu_custom_call.1} parent=1 // pred_check
      _
    $region51: #{tpu_custom_call.1} parent=1 // pred_check_branch
      %85 = sbr.rel (0) target = $region53
    $region52: #{tpu_custom_call.1} parent=1 // pred_region
      %86 = dma.done [#allocation9], 1024
    $region53: #{tpu_custom_call.1} parent=1 // pred_fallthru
      _
    // Predicated region
    $region54: #{tpu_custom_call.1} parent=1 // pred_check
      _
    $region55: #{tpu_custom_call.1} parent=1 // pred_check_branch
      %88 = sbr.rel (0) target = $region57
    $region56: #{tpu_custom_call.1} parent=1 // pred_region
      %89 = dma.done [#allocation12], 1024
    $region57: #{tpu_custom_call.1} parent=1 // pred_fallthru
      _
    // Predicated region
    $region58: #{tpu_custom_call.1} parent=1 // pred_check
      _
    $region59: #{tpu_custom_call.1} parent=1 // pred_check_branch
      %91 = sbr.rel (0) target = $region61
    $region60: #{tpu_custom_call.1} parent=1 // pred_region
      %92 = dma.done [#allocation12], 1024
    $region61: #{tpu_custom_call.1} parent=1 // pred_fallthru
      _
    %v94 = vld [vmem:[%s2] sm:$0xf]
    %v95 = vld [vmem:[%s2 + $0x4] sm:$0xf]
    %v96 = vld [vmem:[%s3] sm:$0xff]
    %v97 = vld [vmem:[%s3 + $0x8] sm:$0xff]
    %v98 = vld [vmem:[#allocation8] sm:$0xf]
    %v99 = vld [vmem:[#allocation8 + $0x4] sm:$0xf]
    %v100 = vld [vmem:[#allocation8 + $0x8] sm:$0xf]
    %v101 = vld [vmem:[#allocation8 + $0xc] sm:$0xf]
    %v102 = vld [vmem:[#allocation8 + $0x10] sm:$0xf]
    %v103 = vld [vmem:[#allocation8 + $0x14] sm:$0xf]
    %v104 = vld [vmem:[#allocation8 + $0x18] sm:$0xf]
    %v105 = vld [vmem:[#allocation8 + $0x1c] sm:$0xf]
    %v106 = vld [vmem:[#allocation8 + $0x20] sm:$0xf]
    %v107 = vld [vmem:[#allocation8 + $0x24] sm:$0xf]
    %v108 = vld [vmem:[#allocation8 + $0x28] sm:$0xf]
    %v109 = vld [vmem:[#allocation8 + $0x2c] sm:$0xf]
    %v110 = vld [vmem:[#allocation8 + $0x30] sm:$0xf]
    %v111 = vld [vmem:[#allocation8 + $0x34] sm:$0xf]
    %v112 = vld [vmem:[#allocation8 + $0x38] sm:$0xf]
    %v113 = vld [vmem:[#allocation8 + $0x3c] sm:$0xf]
    %v114 = vld [vmem:[%s5] sm:$0x1]
    %v115 = vpack.c.bf16 %v97, %v96
    %v118 = vunpack.c.l.b16 %v94
    %v119 = vunpack.c.l.b16 %v95
    %v120 = vpack.c.b16 %v119, %v118
    %vm121 = vcmask 130048
    %v123 = vsel %vm121, %v120, 0
    %125 = vmatprep.subr.bf16.mxu0 0
    %126 = vmatpush1.bf16.msra.mxu0 %v115
    %127 = vmatprep.subr.bf16.mxu0 0
    %128 = vmatpush1.bf16.msra.mxu0 0
    %129 = vmatprep.subr.bf16.mxu0 0
    %130 = vmatpush1.bf16.msra.mxu0 0
    %131 = vmatprep.subr.bf16.mxu0 0
    %132 = vmatpush1.bf16.msra.mxu0 0
    %133 = vmatprep.subr.bf16.mxu0 0
    %134 = vmatpush1.bf16.msra.mxu0 0
    %135 = vmatprep.subr.bf16.mxu0 0
    %136 = vmatpush1.bf16.msra.mxu0 0
    %137 = vmatprep.subr.bf16.mxu0 0
    %138 = vmatpush1.bf16.msra.mxu0 0
    %139 = vmatprep.subr.bf16.mxu0 0
    %140 = vmatpush1.bf16.msra.mxu0 0
    %141 = vmatprep.subr.bf16.mxu0 0
    %142 = vmatpush1.bf16.msra.mxu0 0
    %143 = vmatprep.subr.bf16.mxu0 0
    %144 = vmatpush1.bf16.msra.mxu0 0
    %145 = vmatprep.subr.bf16.mxu0 0
    %146 = vmatpush1.bf16.msra.mxu0 0
    %147 = vmatprep.subr.bf16.mxu0 0
    %148 = vmatpush1.bf16.msra.mxu0 0
    %149 = vmatprep.subr.bf16.mxu0 0
    %150 = vmatpush1.bf16.msra.mxu0 0
    %151 = vmatprep.subr.bf16.mxu0 0
    %152 = vmatpush1.bf16.msra.mxu0 0
    %153 = vmatprep.subr.bf16.mxu0 0
    %154 = vmatpush1.bf16.msra.mxu0 0
    %155 = vmatprep.subr.bf16.mxu0 0
    %156 = vmatpush1.bf16.msra.mxu0 0
    %157 = vmatprep.mubr.bf16.mxu0 0
    %158 = vmatmul.mubr.bf16.gmra.mrb[0].mxu0 %v123
    %v159 = vpop.f32.mrb[0].mxu0
    %v160 = vadd.f32 0.0, %v159
    %v161 = vpop.f32.mrb[0].mxu0
    %v162 = vpop.f32.mrb[0].mxu0
    %v163 = vadd.f32 0.0, %v162
    %v164 = vpop.f32.mrb[0].mxu0
    %165 = vdwg.mxu0
    %v166 = vpack.c.bf16 %v163, %v160
    %v168 = vlaneseq
    %v169 = vshrl.u32 %v168, 7
    %v170 = vsub.s32 0, %v169
    %v171 = vrot.slane %v114, %v170
    %v189 = vunpack.c.l.b16 %v98
    %v190 = vunpack.c.l.b16 %v99
    %v191 = vunpack.c.l.b16 %v100
    %v192 = vunpack.c.l.b16 %v101
    %v193 = vunpack.c.l.b16 %v102
    %v194 = vunpack.c.l.b16 %v103
    %v195 = vunpack.c.l.b16 %v104
    %v196 = vunpack.c.l.b16 %v105
    %v197 = vunpack.c.l.b16 %v106
    %v198 = vunpack.c.l.b16 %v107
    %v199 = vunpack.c.l.b16 %v108
    %v200 = vunpack.c.l.b16 %v109
    %v201 = vunpack.c.l.b16 %v110
    %v202 = vunpack.c.l.b16 %v111
    %v203 = vunpack.c.l.b16 %v112
    %v204 = vunpack.c.l.b16 %v113
    %v205 = vpack.c.b16 %v190, %v189
    %v206 = vpack.c.b16 %v192, %v191
    %v207 = vpack.c.b16 %v194, %v193
    %v208 = vpack.c.b16 %v196, %v195
    %v209 = vpack.c.b16 %v198, %v197
    %v210 = vpack.c.b16 %v200, %v199
    %v211 = vpack.c.b16 %v202, %v201
    %v212 = vpack.c.b16 %v204, %v203
    %221 = vmatprep.subr.bf16.mxu0 0
    %222 = vmatpush1.bf16.msra.mxu0 %v205
    %223 = vmatprep.subr.bf16.mxu0 0
    %224 = vmatpush1.bf16.msra.mxu0 %v206
    %225 = vmatprep.subr.bf16.mxu0 0
    %226 = vmatpush1.bf16.msra.mxu0 %v207
    %227 = vmatprep.subr.bf16.mxu0 0
    %228 = vmatpush1.bf16.msra.mxu0 %v208
    %229 = vmatprep.subr.bf16.mxu0 0
    %230 = vmatpush1.bf16.msra.mxu0 %v209
    %231 = vmatprep.subr.bf16.mxu0 0
    %232 = vmatpush1.bf16.msra.mxu0 %v210
    %233 = vmatprep.subr.bf16.mxu0 0
    %234 = vmatpush1.bf16.msra.mxu0 %v211
    %235 = vmatprep.subr.bf16.mxu0 0
    %236 = vmatpush1.bf16.msra.mxu0 %v212
    %237 = vmatprep.subr.bf16.mxu0 0
    %238 = vmatpush1.bf16.msra.mxu0 0
    %239 = vmatprep.subr.bf16.mxu0 0
    %240 = vmatpush1.bf16.msra.mxu0 0
    %241 = vmatprep.subr.bf16.mxu0 0
    %242 = vmatpush1.bf16.msra.mxu0 0
    %243 = vmatprep.subr.bf16.mxu0 0
    %244 = vmatpush1.bf16.msra.mxu0 0
    %245 = vmatprep.subr.bf16.mxu0 0
    %246 = vmatpush1.bf16.msra.mxu0 0
    %247 = vmatprep.subr.bf16.mxu0 0
    %248 = vmatpush1.bf16.msra.mxu0 0
    %249 = vmatprep.subr.bf16.mxu0 0
    %250 = vmatpush1.bf16.msra.mxu0 0
    %251 = vmatprep.subr.bf16.mxu0 0
    %252 = vmatpush1.bf16.msra.mxu0 0
    %253 = vmatprep.mubr.bf16.mxu0 0
    %254 = vmatmul.mubr.bf16.gmra.mrb[0].mxu0 %v166
    %v255 = vpop.f32.mrb[0].mxu0
    %v256 = vadd.f32 %v171, %v255
    %v257 = vpop.f32.mrb[0].mxu0
    %v258 = vpop.f32.mrb[0].mxu0
    %v259 = vadd.f32 %v171, %v258
    %v260 = vpop.f32.mrb[0].mxu0
    %261 = vdwg.mxu0
    %v262 = vmax.f32 %v256, 0.0
    %v263 = vmax.f32 %v259, 0.0
    %v264 = vld [vmem:[#allocation11] sm:$0xf]
    %v265 = vld [vmem:[#allocation11 + $0x4] sm:$0xf]
    %v266 = vld [vmem:[#allocation11 + $0x8] sm:$0xf]
    %v267 = vld [vmem:[#allocation11 + $0xc] sm:$0xf]
    %v268 = vld [vmem:[#allocation11 + $0x10] sm:$0xf]
    %v269 = vld [vmem:[#allocation11 + $0x14] sm:$0xf]
    %v270 = vld [vmem:[#allocation11 + $0x18] sm:$0xf]
    %v271 = vld [vmem:[#allocation11 + $0x1c] sm:$0xf]
    %v272 = vld [vmem:[#allocation11 + $0x20] sm:$0xf]
    %v273 = vld [vmem:[#allocation11 + $0x24] sm:$0xf]
    %v274 = vld [vmem:[#allocation11 + $0x28] sm:$0xf]
    %v275 = vld [vmem:[#allocation11 + $0x2c] sm:$0xf]
    %v276 = vld [vmem:[#allocation11 + $0x30] sm:$0xf]
    %v277 = vld [vmem:[#allocation11 + $0x34] sm:$0xf]
    %v278 = vld [vmem:[#allocation11 + $0x38] sm:$0xf]
    %v279 = vld [vmem:[#allocation11 + $0x3c] sm:$0xf]
    %v280 = vld [vmem:[%s7] sm:$0x1]
    %v281 = vpack.c.bf16 %v263, %v262
    %282 = vmatprep.subr.bf16.mxu0 0
    %283 = vmatpush1.bf16.msra.mxu0 %v281
    %284 = vmatprep.subr.bf16.mxu0 0
    %285 = vmatpush1.bf16.msra.mxu0 0
    %286 = vmatprep.subr.bf16.mxu0 0
    %287 = vmatpush1.bf16.msra.mxu0 0
    %288 = vmatprep.subr.bf16.mxu0 0
    %289 = vmatpush1.bf16.msra.mxu0 0
    %290 = vmatprep.subr.bf16.mxu0 0
    %291 = vmatpush1.bf16.msra.mxu0 0
    %292 = vmatprep.subr.bf16.mxu0 0
    %293 = vmatpush1.bf16.msra.mxu0 0
    %294 = vmatprep.subr.bf16.mxu0 0
    %295 = vmatpush1.bf16.msra.mxu0 0
    %296 = vmatprep.subr.bf16.mxu0 0
    %297 = vmatpush1.bf16.msra.mxu0 0
    %298 = vmatprep.subr.bf16.mxu0 0
    %299 = vmatpush1.bf16.msra.mxu0 0
    %300 = vmatprep.subr.bf16.mxu0 0
    %301 = vmatpush1.bf16.msra.mxu0 0
    %302 = vmatprep.subr.bf16.mxu0 0
    %303 = vmatpush1.bf16.msra.mxu0 0
    %304 = vmatprep.subr.bf16.mxu0 0
    %305 = vmatpush1.bf16.msra.mxu0 0
    %306 = vmatprep.subr.bf16.mxu0 0
    %307 = vmatpush1.bf16.msra.mxu0 0
    %308 = vmatprep.subr.bf16.mxu0 0
    %309 = vmatpush1.bf16.msra.mxu0 0
    %310 = vmatprep.subr.bf16.mxu0 0
    %311 = vmatpush1.bf16.msra.mxu0 0
    %312 = vmatprep.subr.bf16.mxu0 0
    %313 = vmatpush1.bf16.msra.mxu0 0
    %314 = vmatprep.mubr.bf16.mxu0 0
    %315 = vmatmul.mubr.bf16.gmra.mrb[0].mxu0 %v123
    %v316 = vpop.f32.mrb[0].mxu0
    %v317 = vadd.f32 0.0, %v316
    %v318 = vpop.f32.mrb[0].mxu0
    %v319 = vpop.f32.mrb[0].mxu0
    %v320 = vadd.f32 0.0, %v319
    %v321 = vpop.f32.mrb[0].mxu0
    %322 = vdwg.mxu0
    %v323 = vpack.c.bf16 %v320, %v317
    %v325 = vlaneseq
    %v326 = vshrl.u32 %v325, 7
    %v327 = vsub.s32 0, %v326
    %v328 = vrot.slane %v280, %v327
    %v346 = vunpack.c.l.b16 %v264
    %v347 = vunpack.c.l.b16 %v265
    %v348 = vunpack.c.l.b16 %v266
    %v349 = vunpack.c.l.b16 %v267
    %v350 = vunpack.c.l.b16 %v268
    %v351 = vunpack.c.l.b16 %v269
    %v352 = vunpack.c.l.b16 %v270
    %v353 = vunpack.c.l.b16 %v271
    %v354 = vunpack.c.l.b16 %v272
    %v355 = vunpack.c.l.b16 %v273
    %v356 = vunpack.c.l.b16 %v274
    %v357 = vunpack.c.l.b16 %v275
    %v358 = vunpack.c.l.b16 %v276
    %v359 = vunpack.c.l.b16 %v277
    %v360 = vunpack.c.l.b16 %v278
    %v361 = vunpack.c.l.b16 %v279
    %v362 = vpack.c.b16 %v347, %v346
    %v363 = vpack.c.b16 %v349, %v348
    %v364 = vpack.c.b16 %v351, %v350
    %v365 = vpack.c.b16 %v353, %v352
    %v366 = vpack.c.b16 %v355, %v354
    %v367 = vpack.c.b16 %v357, %v356
    %v368 = vpack.c.b16 %v359, %v358
    %v369 = vpack.c.b16 %v361, %v360
    %378 = vmatprep.subr.bf16.mxu0 0
    %379 = vmatpush1.bf16.msra.mxu0 %v362
    %380 = vmatprep.subr.bf16.mxu0 0
    %381 = vmatpush1.bf16.msra.mxu0 %v363
    %382 = vmatprep.subr.bf16.mxu0 0
    %383 = vmatpush1.bf16.msra.mxu0 %v364
    %384 = vmatprep.subr.bf16.mxu0 0
    %385 = vmatpush1.bf16.msra.mxu0 %v365
    %386 = vmatprep.subr.bf16.mxu0 0
    %387 = vmatpush1.bf16.msra.mxu0 %v366
    %388 = vmatprep.subr.bf16.mxu0 0
    %389 = vmatpush1.bf16.msra.mxu0 %v367
    %390 = vmatprep.subr.bf16.mxu0 0
    %391 = vmatpush1.bf16.msra.mxu0 %v368
    %392 = vmatprep.subr.bf16.mxu0 0
    %393 = vmatpush1.bf16.msra.mxu0 %v369
    %394 = vmatprep.subr.bf16.mxu0 0
    %395 = vmatpush1.bf16.msra.mxu0 0
    %396 = vmatprep.subr.bf16.mxu0 0
    %397 = vmatpush1.bf16.msra.mxu0 0
    %398 = vmatprep.subr.bf16.mxu0 0
    %399 = vmatpush1.bf16.msra.mxu0 0
    %400 = vmatprep.subr.bf16.mxu0 0
    %401 = vmatpush1.bf16.msra.mxu0 0
    %402 = vmatprep.subr.bf16.mxu0 0
    %403 = vmatpush1.bf16.msra.mxu0 0
    %404 = vmatprep.subr.bf16.mxu0 0
    %405 = vmatpush1.bf16.msra.mxu0 0
    %406 = vmatprep.subr.bf16.mxu0 0
    %407 = vmatpush1.bf16.msra.mxu0 0
    %408 = vmatprep.subr.bf16.mxu0 0
    %409 = vmatpush1.bf16.msra.mxu0 0
    %410 = vmatprep.mubr.bf16.mxu0 0
    %411 = vmatmul.mubr.bf16.gmra.mrb[0].mxu0 %v323
    %v412 = vpop.f32.mrb[0].mxu0
    %v413 = vadd.f32 %v328, %v412
    %v414 = vpop.f32.mrb[0].mxu0
    %v415 = vpop.f32.mrb[0].mxu0
    %v416 = vadd.f32 %v328, %v415
    %v417 = vpop.f32.mrb[0].mxu0
    %418 = vdwg.mxu0
    %v419 = vmax.f32 %v413, 0.0
    %v420 = vmax.f32 %v416, 0.0
    %v421 = vadd.f32 %v419, %v262
    %v422 = vadd.f32 %v420, %v263
    %v423 = vld [vmem:[#allocation13] sm:$0xf]
    %v424 = vld [vmem:[#allocation13 + $0x4] sm:$0xf]
    %v425 = vld [vmem:[#allocation13 + $0x8] sm:$0xf]
    %v426 = vld [vmem:[#allocation13 + $0xc] sm:$0xf]
    %v427 = vld [vmem:[#allocation13 + $0x10] sm:$0xf]
    %v428 = vld [vmem:[#allocation13 + $0x14] sm:$0xf]
    %v429 = vld [vmem:[#allocation13 + $0x18] sm:$0xf]
    %v430 = vld [vmem:[#allocation13 + $0x1c] sm:$0xf]
    %v431 = vld [vmem:[#allocation13 + $0x20] sm:$0xf]
    %v432 = vld [vmem:[#allocation13 + $0x24] sm:$0xf]
    %v433 = vld [vmem:[#allocation13 + $0x28] sm:$0xf]
    %v434 = vld [vmem:[#allocation13 + $0x2c] sm:$0xf]
    %v435 = vld [vmem:[#allocation13 + $0x30] sm:$0xf]
    %v436 = vld [vmem:[#allocation13 + $0x34] sm:$0xf]
    %v437 = vld [vmem:[#allocation13 + $0x38] sm:$0xf]
    %v438 = vld [vmem:[#allocation13 + $0x3c] sm:$0xf]
    %v439 = vld [vmem:[%s9] sm:$0x1]
    %v440 = vpack.c.bf16 %v422, %v421
    %441 = vmatprep.subr.bf16.mxu0 0
    %442 = vmatpush1.bf16.msra.mxu0 %v440
    %443 = vmatprep.subr.bf16.mxu0 0
    %444 = vmatpush1.bf16.msra.mxu0 0
    %445 = vmatprep.subr.bf16.mxu0 0
    %446 = vmatpush1.bf16.msra.mxu0 0
    %447 = vmatprep.subr.bf16.mxu0 0
    %448 = vmatpush1.bf16.msra.mxu0 0
    %449 = vmatprep.subr.bf16.mxu0 0
    %450 = vmatpush1.bf16.msra.mxu0 0
    %451 = vmatprep.subr.bf16.mxu0 0
    %452 = vmatpush1.bf16.msra.mxu0 0
    %453 = vmatprep.subr.bf16.mxu0 0
    %454 = vmatpush1.bf16.msra.mxu0 0
    %455 = vmatprep.subr.bf16.mxu0 0
    %456 = vmatpush1.bf16.msra.mxu0 0
    %457 = vmatprep.subr.bf16.mxu0 0
    %458 = vmatpush1.bf16.msra.mxu0 0
    %459 = vmatprep.subr.bf16.mxu0 0
    %460 = vmatpush1.bf16.msra.mxu0 0
    %461 = vmatprep.subr.bf16.mxu0 0
    %462 = vmatpush1.bf16.msra.mxu0 0
    %463 = vmatprep.subr.bf16.mxu0 0
    %464 = vmatpush1.bf16.msra.mxu0 0
    %465 = vmatprep.subr.bf16.mxu0 0
    %466 = vmatpush1.bf16.msra.mxu0 0
    %467 = vmatprep.subr.bf16.mxu0 0
    %468 = vmatpush1.bf16.msra.mxu0 0
    %469 = vmatprep.subr.bf16.mxu0 0
    %470 = vmatpush1.bf16.msra.mxu0 0
    %471 = vmatprep.subr.bf16.mxu0 0
    %472 = vmatpush1.bf16.msra.mxu0 0
    %473 = vmatprep.mubr.bf16.mxu0 0
    %474 = vmatmul.mubr.bf16.gmra.mrb[0].mxu0 %v123
    %v475 = vpop.f32.mrb[0].mxu0
    %v476 = vadd.f32 0.0, %v475
    %v477 = vpop.f32.mrb[0].mxu0
    %v478 = vpop.f32.mrb[0].mxu0
    %v479 = vadd.f32 0.0, %v478
    %v480 = vpop.f32.mrb[0].mxu0
    %481 = vdwg.mxu0
    %v482 = vpack.c.bf16 %v479, %v476
    %v484 = vlaneseq
    %v485 = vshrl.u32 %v484, 7
    %v486 = vsub.s32 0, %v485
    %v487 = vrot.slane %v439, %v486
    %v505 = vunpack.c.l.b16 %v423
    %v506 = vunpack.c.l.b16 %v424
    %v507 = vunpack.c.l.b16 %v425
    %v508 = vunpack.c.l.b16 %v426
    %v509 = vunpack.c.l.b16 %v427
    %v510 = vunpack.c.l.b16 %v428
    %v511 = vunpack.c.l.b16 %v429
    %v512 = vunpack.c.l.b16 %v430
    %v513 = vunpack.c.l.b16 %v431
    %v514 = vunpack.c.l.b16 %v432
    %v515 = vunpack.c.l.b16 %v433
    %v516 = vunpack.c.l.b16 %v434
    %v517 = vunpack.c.l.b16 %v435
    %v518 = vunpack.c.l.b16 %v436
    %v519 = vunpack.c.l.b16 %v437
    %v520 = vunpack.c.l.b16 %v438
    %v521 = vpack.c.b16 %v506, %v505
    %v522 = vpack.c.b16 %v508, %v507
    %v523 = vpack.c.b16 %v510, %v509
    %v524 = vpack.c.b16 %v512, %v511
    %v525 = vpack.c.b16 %v514, %v513
    %v526 = vpack.c.b16 %v516, %v515
    %v527 = vpack.c.b16 %v518, %v517
    %v528 = vpack.c.b16 %v520, %v519
    %537 = vmatprep.subr.bf16.mxu0 0
    %538 = vmatpush1.bf16.msra.mxu0 %v521
    %539 = vmatprep.subr.bf16.mxu0 0
    %540 = vmatpush1.bf16.msra.mxu0 %v522
    %541 = vmatprep.subr.bf16.mxu0 0
    %542 = vmatpush1.bf16.msra.mxu0 %v523
    %543 = vmatprep.subr.bf16.mxu0 0
    %544 = vmatpush1.bf16.msra.mxu0 %v524
    %545 = vmatprep.subr.bf16.mxu0 0
    %546 = vmatpush1.bf16.msra.mxu0 %v525
    %547 = vmatprep.subr.bf16.mxu0 0
    %548 = vmatpush1.bf16.msra.mxu0 %v526
    %549 = vmatprep.subr.bf16.mxu0 0
    %550 = vmatpush1.bf16.msra.mxu0 %v527
    %551 = vmatprep.subr.bf16.mxu0 0
    %552 = vmatpush1.bf16.msra.mxu0 %v528
    %553 = vmatprep.subr.bf16.mxu0 0
    %554 = vmatpush1.bf16.msra.mxu0 0
    %555 = vmatprep.subr.bf16.mxu0 0
    %556 = vmatpush1.bf16.msra.mxu0 0
    %557 = vmatprep.subr.bf16.mxu0 0
    %558 = vmatpush1.bf16.msra.mxu0 0
    %559 = vmatprep.subr.bf16.mxu0 0
    %560 = vmatpush1.bf16.msra.mxu0 0
    %561 = vmatprep.subr.bf16.mxu0 0
    %562 = vmatpush1.bf16.msra.mxu0 0
    %563 = vmatprep.subr.bf16.mxu0 0
    %564 = vmatpush1.bf16.msra.mxu0 0
    %565 = vmatprep.subr.bf16.mxu0 0
    %566 = vmatpush1.bf16.msra.mxu0 0
    %567 = vmatprep.subr.bf16.mxu0 0
    %568 = vmatpush1.bf16.msra.mxu0 0
    %569 = vmatprep.mubr.bf16.mxu0 0
    %570 = vmatmul.mubr.bf16.gmra.mrb[0].mxu0 %v482
    %v571 = vpop.f32.mrb[0].mxu0
    %v572 = vadd.f32 %v487, %v571
    %v573 = vpop.f32.mrb[0].mxu0
    %v574 = vpop.f32.mrb[0].mxu0
    %v575 = vadd.f32 %v487, %v574
    %v576 = vpop.f32.mrb[0].mxu0
    %577 = vdwg.mxu0
    %v578 = vmax.f32 %v572, 0.0
    %v579 = vmax.f32 %v575, 0.0
    %v580 = vadd.f32 %v578, %v421
    %v581 = vadd.f32 %v579, %v422
    %582 = vst [vmem:[#allocation2] sm:$0xff] %v580
    %583 = vst [vmem:[#allocation2 + $0x8] sm:$0xff] %v581
    %s584 = sld [smem:[#allocation6]]
    %s585 = scalar_lea.vmem [#allocation2], %s584
    %v586 = vld [vmem:[%s585] sm:$0x1]
    %587 = vst [vmem:[#allocation3] sm:$0x1] %v586
    %s588 = sld [smem:[#allocation7]]
    %s589 = scalar_lea.vmem [#allocation2], %s588
    %v590 = vld [vmem:[%s589] sm:$0x1]
    %591 = vst [vmem:[#allocation4] sm:$0x1] %v590
    %s592 = sld [smem:[#allocation6 + $0x1]]
    %s593 = scalar_lea.vmem [#allocation2], %s592
    %v594 = vld [vmem:[%s593] sm:$0x1]
    %595 = vst [vmem:[#allocation3 + $0x1] sm:$0x1] %v594
    %s596 = sld [smem:[#allocation7 + $0x1]]
    %s597 = scalar_lea.vmem [#allocation2], %s596
    %v598 = vld [vmem:[%s597] sm:$0x1]
    %599 = vst [vmem:[#allocation4 + $0x1] sm:$0x1] %v598
    %s600 = sld [smem:[#allocation6 + $0x2]]
    %s601 = scalar_lea.vmem [#allocation2], %s600
    %v602 = vld [vmem:[%s601] sm:$0x1]
    %603 = vst [vmem:[#allocation3 + $0x2] sm:$0x1] %v602
    %s604 = sld [smem:[#allocation7 + $0x2]]
    %s605 = scalar_lea.vmem [#allocation2], %s604
    %v606 = vld [vmem:[%s605] sm:$0x1]
    %607 = vst [vmem:[#allocation4 + $0x2] sm:$0x1] %v606
    %s608 = sld [smem:[#allocation6 + $0x3]]
    %s609 = scalar_lea.vmem [#allocation2], %s608
    %v610 = vld [vmem:[%s609] sm:$0x1]
    %611 = vst [vmem:[#allocation3 + $0x3] sm:$0x1] %v610
    %s612 = sld [smem:[#allocation7 + $0x3]]
    %s613 = scalar_lea.vmem [#allocation2], %s612
    %v614 = vld [vmem:[%s613] sm:$0x1]
    %615 = vst [vmem:[#allocation4 + $0x3] sm:$0x1] %v614
    %s616 = sld [smem:[#allocation6 + $0x4]]
    %s617 = scalar_lea.vmem [#allocation2], %s616
    %v618 = vld [vmem:[%s617] sm:$0x1]
    %619 = vst [vmem:[#allocation3 + $0x4] sm:$0x1] %v618
    %s620 = sld [smem:[#allocation7 + $0x4]]
    %s621 = scalar_lea.vmem [#allocation2], %s620
    %v622 = vld [vmem:[%s621] sm:$0x1]
    %623 = vst [vmem:[#allocation4 + $0x4] sm:$0x1] %v622
    %s624 = sld [smem:[#allocation6 + $0x5]]
    %s625 = scalar_lea.vmem [#allocation2], %s624
    %v626 = vld [vmem:[%s625] sm:$0x1]
    %627 = vst [vmem:[#allocation3 + $0x5] sm:$0x1] %v626
    %s628 = sld [smem:[#allocation7 + $0x5]]
    %s629 = scalar_lea.vmem [#allocation2], %s628
    %v630 = vld [vmem:[%s629] sm:$0x1]
    %631 = vst [vmem:[#allocation4 + $0x5] sm:$0x1] %v630
    %s632 = sld [smem:[#allocation6 + $0x6]]
    %s633 = scalar_lea.vmem [#allocation2], %s632
    %v634 = vld [vmem:[%s633] sm:$0x1]
    %635 = vst [vmem:[#allocation3 + $0x6] sm:$0x1] %v634
    %s636 = sld [smem:[#allocation7 + $0x6]]
    %s637 = scalar_lea.vmem [#allocation2], %s636
    %v638 = vld [vmem:[%s637] sm:$0x1]
    %639 = vst [vmem:[#allocation4 + $0x6] sm:$0x1] %v638
    %s640 = sld [smem:[#allocation6 + $0x7]]
    %s641 = scalar_lea.vmem [#allocation2], %s640
    %v642 = vld [vmem:[%s641] sm:$0x1]
    %643 = vst [vmem:[#allocation3 + $0x7] sm:$0x1] %v642
    %s644 = sld [smem:[#allocation7 + $0x7]]
    %s645 = scalar_lea.vmem [#allocation2], %s644
    %v646 = vld [vmem:[%s645] sm:$0x1]
    %647 = vst [vmem:[#allocation4 + $0x7] sm:$0x1] %v646
    %s648 = sld [smem:[#allocation6 + $0x8]]
    %s649 = scalar_lea.vmem [#allocation2], %s648
    %v650 = vld [vmem:[%s649] sm:$0x1]
    %651 = vst [vmem:[#allocation3 + $0x8] sm:$0x1] %v650
    %s652 = sld [smem:[#allocation7 + $0x8]]
    %s653 = scalar_lea.vmem [#allocation2], %s652
    %v654 = vld [vmem:[%s653] sm:$0x1]
    %655 = vst [vmem:[#allocation4 + $0x8] sm:$0x1] %v654
    %s656 = sld [smem:[#allocation6 + $0x9]]
    %s657 = scalar_lea.vmem [#allocation2], %s656
    %v658 = vld [vmem:[%s657] sm:$0x1]
    %659 = vst [vmem:[#allocation3 + $0x9] sm:$0x1] %v658
    %s660 = sld [smem:[#allocation7 + $0x9]]
    %s661 = scalar_lea.vmem [#allocation2], %s660
    %v662 = vld [vmem:[%s661] sm:$0x1]
    %663 = vst [vmem:[#allocation4 + $0x9] sm:$0x1] %v662
    %s664 = sld [smem:[#allocation6 + $0xa]]
    %s665 = scalar_lea.vmem [#allocation2], %s664
    %v666 = vld [vmem:[%s665] sm:$0x1]
    %667 = vst [vmem:[#allocation3 + $0xa] sm:$0x1] %v666
    %s668 = sld [smem:[#allocation7 + $0xa]]
    %s669 = scalar_lea.vmem [#allocation2], %s668
    %v670 = vld [vmem:[%s669] sm:$0x1]
    %671 = vst [vmem:[#allocation4 + $0xa] sm:$0x1] %v670
    %s672 = sld [smem:[#allocation6 + $0xb]]
    %s673 = scalar_lea.vmem [#allocation2], %s672
    %v674 = vld [vmem:[%s673] sm:$0x1]
    %675 = vst [vmem:[#allocation3 + $0xb] sm:$0x1] %v674
    %s676 = sld [smem:[#allocation7 + $0xb]]
    %s677 = scalar_lea.vmem [#allocation2], %s676
    %v678 = vld [vmem:[%s677] sm:$0x1]
    %679 = vst [vmem:[#allocation4 + $0xb] sm:$0x1] %v678
    %s680 = sld [smem:[#allocation6 + $0xc]]
    %s681 = scalar_lea.vmem [#allocation2], %s680
    %v682 = vld [vmem:[%s681] sm:$0x1]
    %683 = vst [vmem:[#allocation3 + $0xc] sm:$0x1] %v682
    %s684 = sld [smem:[#allocation7 + $0xc]]
    %s685 = scalar_lea.vmem [#allocation2], %s684
    %v686 = vld [vmem:[%s685] sm:$0x1]
    %687 = vst [vmem:[#allocation4 + $0xc] sm:$0x1] %v686
    %s688 = sld [smem:[#allocation6 + $0xd]]
    %s689 = scalar_lea.vmem [#allocation2], %s688
    %v690 = vld [vmem:[%s689] sm:$0x1]
    %691 = vst [vmem:[#allocation3 + $0xd] sm:$0x1] %v690
    %s692 = sld [smem:[#allocation7 + $0xd]]
    %s693 = scalar_lea.vmem [#allocation2], %s692
    %v694 = vld [vmem:[%s693] sm:$0x1]
    %695 = vst [vmem:[#allocation4 + $0xd] sm:$0x1] %v694
    %s696 = sld [smem:[#allocation6 + $0xe]]
    %s697 = scalar_lea.vmem [#allocation2], %s696
    %v698 = vld [vmem:[%s697] sm:$0x1]
    %699 = vst [vmem:[#allocation3 + $0xe] sm:$0x1] %v698
    %s700 = sld [smem:[#allocation7 + $0xe]]
    %s701 = scalar_lea.vmem [#allocation2], %s700
    %v702 = vld [vmem:[%s701] sm:$0x1]
    %703 = vst [vmem:[#allocation4 + $0xe] sm:$0x1] %v702
    %s704 = sld [smem:[#allocation6 + $0xf]]
    %s705 = scalar_lea.vmem [#allocation2], %s704
    %v706 = vld [vmem:[%s705] sm:$0x1]
    %707 = vst [vmem:[#allocation3 + $0xf] sm:$0x1] %v706
    %s708 = sld [smem:[#allocation7 + $0xf]]
    %s709 = scalar_lea.vmem [#allocation2], %s708
    %v710 = vld [vmem:[%s709] sm:$0x1]
    %711 = vst [vmem:[#allocation4 + $0xf] sm:$0x1] %v710
    %s712 = sld [smem:[#allocation6 + $0x10]]
    %s713 = scalar_lea.vmem [#allocation2], %s712
    %v714 = vld [vmem:[%s713] sm:$0x1]
    %715 = vst [vmem:[#allocation3 + $0x10] sm:$0x1] %v714
    %s716 = sld [smem:[#allocation7 + $0x10]]
    %s717 = scalar_lea.vmem [#allocation2], %s716
    %v718 = vld [vmem:[%s717] sm:$0x1]
    %719 = vst [vmem:[#allocation4 + $0x10] sm:$0x1] %v718
    %s720 = sld [smem:[#allocation6 + $0x11]]
    %s721 = scalar_lea.vmem [#allocation2], %s720
    %v722 = vld [vmem:[%s721] sm:$0x1]
    %723 = vst [vmem:[#allocation3 + $0x11] sm:$0x1] %v722
    %s724 = sld [smem:[#allocation7 + $0x11]]
    %s725 = scalar_lea.vmem [#allocation2], %s724
    %v726 = vld [vmem:[%s725] sm:$0x1]
    %727 = vst [vmem:[#allocation4 + $0x11] sm:$0x1] %v726
    %s728 = sld [smem:[#allocation6 + $0x12]]
    %s729 = scalar_lea.vmem [#allocation2], %s728
    %v730 = vld [vmem:[%s729] sm:$0x1]
    %731 = vst [vmem:[#allocation3 + $0x12] sm:$0x1] %v730
    %s732 = sld [smem:[#allocation7 + $0x12]]
    %s733 = scalar_lea.vmem [#allocation2], %s732
    %v734 = vld [vmem:[%s733] sm:$0x1]
    %735 = vst [vmem:[#allocation4 + $0x12] sm:$0x1] %v734
    %s736 = sld [smem:[#allocation6 + $0x13]]
    %s737 = scalar_lea.vmem [#allocation2], %s736
    %v738 = vld [vmem:[%s737] sm:$0x1]
    %739 = vst [vmem:[#allocation3 + $0x13] sm:$0x1] %v738
    %s740 = sld [smem:[#allocation7 + $0x13]]
    %s741 = scalar_lea.vmem [#allocation2], %s740
    %v742 = vld [vmem:[%s741] sm:$0x1]
    %743 = vst [vmem:[#allocation4 + $0x13] sm:$0x1] %v742
    %s744 = sld [smem:[#allocation6 + $0x14]]
    %s745 = scalar_lea.vmem [#allocation2], %s744
    %v746 = vld [vmem:[%s745] sm:$0x1]
    %747 = vst [vmem:[#allocation3 + $0x14] sm:$0x1] %v746
    %s748 = sld [smem:[#allocation7 + $0x14]]
    %s749 = scalar_lea.vmem [#allocation2], %s748
    %v750 = vld [vmem:[%s749] sm:$0x1]
    %751 = vst [vmem:[#allocation4 + $0x14] sm:$0x1] %v750
    %s752 = sld [smem:[#allocation6 + $0x15]]
    %s753 = scalar_lea.vmem [#allocation2], %s752
    %v754 = vld [vmem:[%s753] sm:$0x1]
    %755 = vst [vmem:[#allocation3 + $0x15] sm:$0x1] %v754
    %s756 = sld [smem:[#allocation7 + $0x15]]
    %s757 = scalar_lea.vmem [#allocation2], %s756
    %v758 = vld [vmem:[%s757] sm:$0x1]
    %759 = vst [vmem:[#allocation4 + $0x15] sm:$0x1] %v758
    %s760 = sld [smem:[#allocation6 + $0x16]]
    %s761 = scalar_lea.vmem [#allocation2], %s760
    %v762 = vld [vmem:[%s761] sm:$0x1]
    %763 = vst [vmem:[#allocation3 + $0x16] sm:$0x1] %v762
    %s764 = sld [smem:[#allocation7 + $0x16]]
    %s765 = scalar_lea.vmem [#allocation2], %s764
    %v766 = vld [vmem:[%s765] sm:$0x1]
    %767 = vst [vmem:[#allocation4 + $0x16] sm:$0x1] %v766
    %s768 = sld [smem:[#allocation6 + $0x17]]
    %s769 = scalar_lea.vmem [#allocation2], %s768
    %v770 = vld [vmem:[%s769] sm:$0x1]
    %771 = vst [vmem:[#allocation3 + $0x17] sm:$0x1] %v770
    %s772 = sld [smem:[#allocation7 + $0x17]]
    %s773 = scalar_lea.vmem [#allocation2], %s772
    %v774 = vld [vmem:[%s773] sm:$0x1]
    %775 = vst [vmem:[#allocation4 + $0x17] sm:$0x1] %v774
    %v776 = vld [vmem:[#allocation3] sm:$0xff]
    %v777 = vld [vmem:[#allocation3 + $0x8] sm:$0xff]
    %v778 = vld [vmem:[#allocation3 + $0x10] sm:$0xff]
    %v779 = vld [vmem:[#allocation4] sm:$0xff]
    %v780 = vld [vmem:[#allocation4 + $0x8] sm:$0xff]
    %v781 = vld [vmem:[#allocation4 + $0x10] sm:$0xff]
    %v782 = vmul.f32 %v776, %v779
    %v783 = vmul.f32 %v777, %v780
    %v784 = vmul.f32 %v778, %v781
    %785 = vadd.xlane.f32.xlu0 %v782
    %v786 = vpop.xlane.xlu0 %785
    %787 = vadd.xlane.f32.xlu0 %v783
    %v788 = vpop.xlane.xlu0 %787
    %789 = vadd.xlane.f32.xlu0 %v784
    %v790 = vpop.xlane.xlu0 %789
    %v791 = vld [vmem:[%s10] sm:$0xff]
    %v792 = vld [vmem:[%s10 + $0x8] sm:$0xff]
    %v793 = vld [vmem:[%s10 + $0x10] sm:$0xff]
    %v794 = vld [vmem:[%s11] sm:$0x3f]
    %v795 = vld [vmem:[%s13] sm:$0x1]
    %v797 = vlaneseq
    %v798 = vshrl.u32 %v797, 7
    %v799 = vsub.s32 0, %v798
    %v800 = vrot.slane %v795, %v799
    %803 = vset.pattern.permute.xlu0 0
    %804 = vperm.xlu0 %803, %v791
    %v805 = vpop.permute.xlu0 %804
    %808 = vset.pattern.permute.xlu0 0
    %809 = vperm.xlu0 %808, %v792
    %v810 = vpop.permute.xlu0 %809
    %813 = vset.pattern.permute.xlu0 0
    %814 = vperm.xlu0 %813, %v793
    %v815 = vpop.permute.xlu0 %814
    %v817 = vlaneseq
    %v818 = vshrl.u32 %v817, 7
    %v819 = vsub.s32 0, %v818
    %v820 = vrot.slane %v794, %v819
    %v821 = vmul.f32 %v805, %v820
    %v822 = vmul.f32 %v810, %v820
    %v823 = vmul.f32 %v815, %v820
    %v824 = vadd.f32 %v800, %v821
    %v825 = vadd.f32 %v800, %v822
    %v826 = vadd.f32 %v800, %v823
    %827 = vset.pattern.permute.xlu0 1
    %828 = vperm.xlu0 %827, %v791
    %v829 = vpop.permute.xlu0 %828
    %831 = vset.pattern.permute.xlu0 1
    %832 = vperm.xlu0 %831, %v792
    %v833 = vpop.permute.xlu0 %832
    %835 = vset.pattern.permute.xlu0 1
    %836 = vperm.xlu0 %835, %v793
    %v837 = vpop.permute.xlu0 %836
    %v839 = vlaneseq
    %v840 = vshrl.u32 %v839, 7
    %v841 = vsub.s32 1, %v840
    %v842 = vrot.slane %v794, %v841
    %v843 = vmul.f32 %v829, %v842
    %v844 = vmul.f32 %v833, %v842
    %v845 = vmul.f32 %v837, %v842
    %v846 = vadd.f32 %v824, %v843
    %v847 = vadd.f32 %v825, %v844
    %v848 = vadd.f32 %v826, %v845
    %849 = vset.pattern.permute.xlu0 2
    %850 = vperm.xlu0 %849, %v791
    %v851 = vpop.permute.xlu0 %850
    %853 = vset.pattern.permute.xlu0 2
    %854 = vperm.xlu0 %853, %v792
    %v855 = vpop.permute.xlu0 %854
    %857 = vset.pattern.permute.xlu0 2
    %858 = vperm.xlu0 %857, %v793
    %v859 = vpop.permute.xlu0 %858
    %v861 = vlaneseq
    %v862 = vshrl.u32 %v861, 7
    %v863 = vsub.s32 2, %v862
    %v864 = vrot.slane %v794, %v863
    %v865 = vmul.f32 %v851, %v864
    %v866 = vmul.f32 %v855, %v864
    %v867 = vmul.f32 %v859, %v864
    %v868 = vadd.f32 %v846, %v865
    %v869 = vadd.f32 %v847, %v866
    %v870 = vadd.f32 %v848, %v867
    %871 = vset.pattern.permute.xlu0 3
    %872 = vperm.xlu0 %871, %v791
    %v873 = vpop.permute.xlu0 %872
    %875 = vset.pattern.permute.xlu0 3
    %876 = vperm.xlu0 %875, %v792
    %v877 = vpop.permute.xlu0 %876
    %879 = vset.pattern.permute.xlu0 3
    %880 = vperm.xlu0 %879, %v793
    %v881 = vpop.permute.xlu0 %880
    %v883 = vlaneseq
    %v884 = vshrl.u32 %v883, 7
    %v885 = vsub.s32 3, %v884
    %v886 = vrot.slane %v794, %v885
    %v887 = vmul.f32 %v873, %v886
    %v888 = vmul.f32 %v877, %v886
    %v889 = vmul.f32 %v881, %v886
    %v890 = vadd.f32 %v868, %v887
    %v891 = vadd.f32 %v869, %v888
    %v892 = vadd.f32 %v870, %v889
    %893 = vset.pattern.permute.xlu0 4
    %894 = vperm.xlu0 %893, %v791
    %v895 = vpop.permute.xlu0 %894
    %897 = vset.pattern.permute.xlu0 4
    %898 = vperm.xlu0 %897, %v792
    %v899 = vpop.permute.xlu0 %898
    %901 = vset.pattern.permute.xlu0 4
    %902 = vperm.xlu0 %901, %v793
    %v903 = vpop.permute.xlu0 %902
    %v905 = vlaneseq
    %v906 = vshrl.u32 %v905, 7
    %v907 = vsub.s32 4, %v906
    %v908 = vrot.slane %v794, %v907
    %v909 = vmul.f32 %v895, %v908
    %v910 = vmul.f32 %v899, %v908
    %v911 = vmul.f32 %v903, %v908
    %v912 = vadd.f32 %v890, %v909
    %v913 = vadd.f32 %v891, %v910
    %v914 = vadd.f32 %v892, %v911
    %915 = vset.pattern.permute.xlu0 5
    %916 = vperm.xlu0 %915, %v791
    %v917 = vpop.permute.xlu0 %916
    %919 = vset.pattern.permute.xlu0 5
    %920 = vperm.xlu0 %919, %v792
    %v921 = vpop.permute.xlu0 %920
    %923 = vset.pattern.permute.xlu0 5
    %924 = vperm.xlu0 %923, %v793
    %v925 = vpop.permute.xlu0 %924
    %v927 = vlaneseq
    %v928 = vshrl.u32 %v927, 7
    %v929 = vsub.s32 5, %v928
    %v930 = vrot.slane %v794, %v929
    %v931 = vmul.f32 %v917, %v930
    %v932 = vmul.f32 %v921, %v930
    %v933 = vmul.f32 %v925, %v930
    %v934 = vadd.f32 %v912, %v931
    %v935 = vadd.f32 %v913, %v932
    %v936 = vadd.f32 %v914, %v933
    %v937 = vld [vmem:[%s12] sm:$0x1]
    %v939 = vlaneseq
    %v940 = vshrl.u32 %v939, 7
    %v941 = vsub.s32 0, %v940
    %v942 = vrot.slane %v937, %v941
    %v944 = vmul.f32 %v786, %v942
    %v945 = vmul.f32 %v788, %v942
    %v946 = vmul.f32 %v790, %v942
    %v947 = vadd.f32 %v934, %v944
    %v948 = vadd.f32 %v935, %v945
    %v949 = vadd.f32 %v936, %v946
    %950 = vst [vmem:[#allocation14] sm:$0xff] %v947
    %951 = vst [vmem:[#allocation14 + $0x8] sm:$0xff] %v948
    %952 = vst [vmem:[#allocation14 + $0x10] sm:$0xff] %v949
    // Predicated region
    $region62: #{tpu_custom_call.1} parent=1 // pred_check
      _
    $region63: #{tpu_custom_call.1} parent=1 // pred_check_branch
      %954 = sbr.rel (0) target = $region65
    $region64: #{tpu_custom_call.1} parent=1 // pred_region
      %s956 = ssub.s32 384, 384
      %957 = vsyncadd [#allocation10], %s956
      %s958 = sshll.u32 [#allocation14], 4
      %s959 = int_to_ptr.vmem [resolvable:$true] %s958
      %964 = dma.vmem_to_hbm [thread:$0]  %s959, 384, %s14, [#allocation10], 128, 128, 8
    $region65: #{tpu_custom_call.1} parent=1 // pred_fallthru
      _
    // Predicated region
    $region66: #{tpu_custom_call.1} parent=1 // pred_check
      _
    $region67: #{tpu_custom_call.1} parent=1 // pred_check_branch
      %966 = sbr.rel (0) target = $region69
    $region68: #{tpu_custom_call.1} parent=1 // pred_region
      %967 = dma.done [#allocation10], 384
    $region69: #{tpu_custom_call.1} parent=1 // pred_fallthru
      _
    %968 = vsyncpa [#allocation9], 1
    %969 = vsyncpa [#allocation12], 1
    %970 = vsyncpa [#allocation10], 1

</llo_original>
